<compile_context>
chip_gen: v5e
topology: v5e:2x2
jax: 0.10.0
libtpu: 0.0.40
codegen_flags: <defaults>
</compile_context>

<pallas_src>
import numpy as np
import jax
import jax.numpy as jnp
from jax.experimental import pallas as pl
from jax.experimental.pallas import tpu as pltpu

_SQRT_HALF = 0.7071067811865476


def _round_up(x, m):
    return ((x + m - 1) // m) * m


def _erf(x):
    # Abramowitz & Stegun 7.1.26 (|err| < 1.5e-7); abs/exp/mul/add/where only.
    ax = jnp.abs(x)
    t = pl.reciprocal(1.0 + 0.3275911 * ax, approx=False)
    poly = ((((1.061405429 * t - 1.453152027) * t + 1.421413741) * t
             - 0.284496736) * t + 0.254829592) * t
    y = 1.0 - poly * jnp.exp(-ax * ax)
    return jnp.where(x >= 0, y, -y)


def _gelu(x):
    # exact (erf-based) GELU, matching torch.nn.functional.gelu's default.
    return 0.5 * x * (1.0 + _erf(x * _SQRT_HALF))


# ---------------------------------------------------------------------------
# The fused Pallas kernel: grid = (batch tiles, Fourier blocks)
# ---------------------------------------------------------------------------
def _fno1d_kernel(x_ref, a0_ref, g0_ref, T_ref, bT_ref, w1_ref, b1_ref,
                  w2_ref, b2_ref, o_ref, h_ref):
    l = pl.program_id(1)
    n_blocks = pl.num_programs(1)

    # ---- fc0 lift prologue (runs at block 0 of each batch tile) ------------
    # The grid-coordinate channel and the fc0 bias are folded into the
    # constant row g0, so fc0 is one matmul + one add.  Weights may be bf16;
    # activations and accumulation stay f32.
    @pl.when(l == 0)
    def _():
        h_ref[...] = (jnp.dot(x_ref[...], a0_ref[...],
                              preferred_element_type=jnp.float32)
                      + g0_ref[...])                               # (bt, S*W)

    # ---- Fourier block l: one dense (S*W, S*W) operator --------------------
    #   T_l = iDFT_K . W_spec_l . DFT_K + I_S (x) W_conv_l  (collapsed at init)
    h = (jnp.dot(h_ref[...], T_ref[...], preferred_element_type=jnp.float32)
         + bT_ref[...])

    @pl.when(l < n_blocks - 1)                       # GELU after blocks 0..2
    def _():
        h_ref[...] = _gelu(h)

    # ---- fc1 -> GELU -> fc2 epilogue + ONE coalesced store (last block) ----
    @pl.when(l == n_blocks - 1)
    def _():
        btile = h.shape[0]
        width = w1_ref.shape[0]
        n_pos = h.shape[1] // width
        # (bt, S*W) -> (S*bt, W): static lane slices + sublane concat (s-major
        # row order).  Touches only a few KB; avoids jnp.reshape entirely.
        h2 = jnp.concatenate(
            [h[:, s * width:(s + 1) * width] for s in range(n_pos)], axis=0)
        z = jnp.dot(h2, w1_ref[...],
                    preferred_element_type=jnp.float32) + b1_ref[...]
        z = _gelu(z)                                           # (S*bt, 128)
        # fc2 (128 -> 1) as a lane reduction (avoids an N=1 MXU matmul).
        r = jnp.sum(z * w2_ref[...], axis=1, keepdims=True)   # (S*bt, 1)
        # (S*bt, 1) -> (bt, S): sublane slices + lane concat, single store.
        o = jnp.concatenate(
            [r[s * btile:(s + 1) * btile, :] for s in range(n_pos)], axis=1)
        o_ref[...] = (o + b2_ref[...]).astype(o_ref.dtype)


def fno1d_forward_pallas(x_in, ops, *, batch_tile=128):
    """x_in: (B, S, 1) -> (B, S, 1); a single fused pallas_call."""
    B, S, _ = x_in.shape
    n_blocks, SW, _ = ops['T'].shape
    x2d = x_in[..., 0].astype(jnp.float32)                       # (B, S)

    # Batch tiling: pad to a sublane multiple; the default 128-row tile keeps
    # the MXU M dimension full once the model is fed realistic batches.
    bt = _round_up(min(batch_tile, _round_up(B, 8)), 8)
    Bp = _round_up(B, bt)
    if Bp != B:
        x2d = jnp.pad(x2d, ((0, Bp - B), (0, 0)))

    in_specs = [
        # streamed batch tile of the input
        pl.BlockSpec((bt, S), lambda b, l: (b, 0)),
        # weights resident across the whole grid (constant index_maps)
        pl.BlockSpec(ops['a_fc0'].shape, lambda b, l: (0, 0)),
        pl.BlockSpec(ops['g_fc0'].shape, lambda b, l: (0, 0)),
        # per-block operators: streamed / double-buffered along the block axis
        pl.BlockSpec((None, SW, SW), lambda b, l: (l, 0, 0)),
        pl.BlockSpec((None, 1, SW), lambda b, l: (l, 0, 0)),
        # fc1 / fc2 head (tiny, resident)
        pl.BlockSpec(ops['w1'].shape, lambda b, l: (0, 0)),
        pl.BlockSpec(ops['b1'].shape, lambda b, l: (0, 0)),
        pl.BlockSpec(ops['w2'].shape, lambda b, l: (0, 0)),
        pl.BlockSpec(ops['b2'].shape, lambda b, l: (0, 0)),
    ]

    out = pl.pallas_call(
        _fno1d_kernel,
        out_shape=jax.ShapeDtypeStruct((Bp, S), jnp.float32),
        grid=(Bp // bt, n_blocks),
        in_specs=in_specs,
        out_specs=pl.BlockSpec((bt, S), lambda b, l: (b, 0)),
        scratch_shapes=[pltpu.VMEM((bt, SW), jnp.float32)],
        compiler_params=pltpu.CompilerParams(
            # batch axis parallel (v7x: 2 TCs), Fourier-block axis sequential.
            # VMEM stays far under the 32 MiB scoped default at these sizes;
            # raise vmem_limit_bytes only when scaling S*W / the batch tile.
            dimension_semantics=("parallel", "arbitrary")),
    )(x2d, ops['a_fc0'], ops['g_fc0'], ops['T'], ops['bT'],
      ops['w1'], ops['b1'], ops['w2'], ops['b2'])
    return out[:B].reshape(B, S, 1)


# ---------------------------------------------------------------------------
# Init-time precomputation (pure jnp, jit-safe): DFT bases, dense per-mode
# weights, collapsed per-block operators and fc0/fc1/fc2 operators.
# ---------------------------------------------------------------------------
def make_dft_bases(S, K):
    n = np.arange(S, dtype=np.float64)
    k = np.arange(K, dtype=np.float64)
    ang = 2.0 * np.pi * np.outer(k, n) / S                         # (K, S)
    dftc = np.cos(ang).astype(np.float32)
    dfts = np.sin(ang).astype(np.float32)
    coef = np.where((np.arange(K) == 0) | (2 * np.arange(K) == S), 1.0, 2.0)
    idftc_t = ((coef[None, :] / S) * np.cos(ang).T).astype(np.float32)   # (S, K)
    idfts_t = (-(coef[None, :] / S) * np.sin(ang).T).astype(np.float32)  # (S, K)
    return (jnp.asarray(dftc), jnp.asarray(dfts),
            jnp.asarray(idftc_t), jnp.asarray(idfts_t))


def _block_diag_modes(w_part):
    """(8, ci, co, K) grouped weights -> dense per-mode (K, 8*ci, 8*co)."""
    H, ci, co, K = w_part.shape
    wt = jnp.transpose(w_part, (3, 0, 1, 2))                       # (K, H, ci, co)
    eye = jnp.eye(H, dtype=w_part.dtype)
    full = jnp.einsum('hg,khio->khigo', eye, wt)                   # (K,H,ci,H,co)
    return full.reshape(K, H * ci, H * co)


def _collapse_block(spec_r, spec_i, w_conv, b_conv, bases, S, C):
    """Collapse SpectralConv1d + 1x1 Conv1d into one (S*C, S*C) operator."""
    dftc, dfts, idftc_t, idfts_t = bases
    Wr = _block_diag_modes(spec_r)                                 # (K, C, C)
    Wi = _block_diag_modes(spec_i)
    T_spec = (jnp.einsum('tk,ks,kcd->sctd', idftc_t, dftc, Wr)
              + jnp.einsum('tk,ks,kcd->sctd', idftc_t, dfts, Wi)
              + jnp.einsum('tk,ks,kcd->sctd', idfts_t, dftc, Wi)
              - jnp.einsum('tk,ks,kcd->sctd', idfts_t, dfts, Wr)
              ).reshape(S * C, S * C)
    T_conv = jnp.kron(jnp.eye(S, dtype=jnp.float32), w_conv)       # (S*C, S*C)
    brow = jnp.tile(b_conv, S).reshape(1, S * C)
    return T_spec + T_conv, brow


def build_fused_operands(p, S, bases, weight_dtype=jnp.bfloat16):
    """Precompute (once, at init) the operators consumed by the fused kernel."""
    C = p['fc0_w'].shape[1]                                        # width
    # fc0: h0 = x(B,S) @ A0 + g0  with A0 = I_S (x) w0[0:1,:].
    a_fc0 = jnp.kron(jnp.eye(S, dtype=jnp.float32), p['fc0_w'][0:1, :])
    grid = jnp.linspace(0.0, 1.0, S, dtype=jnp.float32)
    g_fc0 = (grid[:, None] * p['fc0_w'][1][None, :]
             + p['fc0_b'][None, :]).reshape(1, S * C)

    Ts, bTs = [], []
    for l in range(4):
        T_l, b_l = _collapse_block(p['spec_r'][l], p['spec_i'][l],
                                   p['w_conv'][l], p['b_conv'][l],
                                   bases, S, C)
        Ts.append(T_l)
        bTs.append(b_l)
    T = jnp.stack(Ts, axis=0)                                      # (4, S*C, S*C)
    bT = jnp.stack(bTs, axis=0)                                    # (4, 1, S*C)

    # fc1/fc2 head: plain (C,128) fc1 weight (no kron inflation); fc2 as a
    # (1,128) row consumed by a lane reduction in-kernel.
    w1 = p['fc1_w']                                                # (C, 128)
    b1 = p['fc1_b'].reshape(1, -1)
    w2 = p['fc2_w'].reshape(1, -1)                                 # (1, 128)
    b2 = p['fc2_b'].reshape(1, 1)

    # Large operators in weight_dtype (bf16 by default: halves HBM weight
    # traffic); biases / constant rows stay f32, dots accumulate in f32.
    return dict(
        a_fc0=a_fc0.astype(weight_dtype),
        g_fc0=g_fc0.astype(jnp.float32),
        T=T.astype(weight_dtype),
        bT=bT.astype(jnp.float32),
        w1=w1.astype(weight_dtype),
        b1=b1.astype(jnp.float32),
        w2=w2.astype(jnp.float32),
        b2=b2.astype(jnp.float32))


def init_params(key, width, S, modes):
    K = min(S // 2, modes)
    H = 8
    ci = co = width // H
    ks = jax.random.split(key, 24)

    def lin(k, fan_in, shape):
        bound = 1.0 / np.sqrt(fan_in)
        return jax.random.uniform(k, shape, jnp.float32, -bound, bound)

    p = {}
    p['fc0_w'] = lin(ks[0], 2, (2, width))
    p['fc0_b'] = lin(ks[1], 2, (width,))
    scale = 1.0 / (width * width)
    p['spec_r'], p['spec_i'], p['w_conv'], p['b_conv'] = [], [], [], []
    idx = 2
    for _ in range(4):
        p['spec_r'].append(scale * jax.random.uniform(
            ks[idx], (H, ci, co, K), jnp.float32)); idx += 1
        p['spec_i'].append(scale * jax.random.uniform(
            ks[idx], (H, ci, co, K), jnp.float32)); idx += 1
        p['w_conv'].append(lin(ks[idx], width, (width, width))); idx += 1
        p['b_conv'].append(lin(ks[idx], width, (width,))); idx += 1
    p['fc1_w'] = lin(ks[idx], width, (width, 128)); idx += 1
    p['fc1_b'] = lin(ks[idx], width, (128,)); idx += 1
    p['fc2_w'] = lin(ks[idx], 128, (128, 1)); idx += 1
    p['fc2_b'] = lin(ks[idx], 128, (1,)); idx += 1
    return p, K


# ---------------------------------------------------------------------------
# Pure-JAX reference (FFT-based), used only to validate the kernel.
# ---------------------------------------------------------------------------
def _spectral_conv_ref(x_bcs, w_r, w_i):
    B, C, S = x_bcs.shape
    H, ci, co, K = w_r.shape
    xft = jnp.fft.rfft(x_bcs, axis=-1)                       # (B, C, S//2+1)
    xg = xft.reshape(B, H, ci, S // 2 + 1)
    w = (w_r + 1j * w_i).astype(jnp.complex64)
    out = jnp.einsum('bhik,hiok->bhok', xg[..., :K], w)      # (B, H, co, K)
    out_ft = jnp.zeros((B, C, S // 2 + 1), dtype=jnp.complex64)
    out_ft = out_ft.at[:, :, :K].set(out.reshape(B, C, K))
    return jnp.fft.irfft(out_ft, n=S, axis=-1)               # (B, C, S)


def fno1d_forward_ref(x_in, p):
    B, S, _ = x_in.shape
    gridx = jnp.linspace(0.0, 1.0, S, dtype=jnp.float32).reshape(1, S, 1)
    x = jnp.concatenate([x_in, jnp.broadcast_to(gridx, (B, S, 1))], axis=-1)
    x = x @ p['fc0_w'] + p['fc0_b']
    x = jnp.transpose(x, (0, 2, 1))                          # (B, C, S)
    for l in range(4):
        x1 = _spectral_conv_ref(x, p['spec_r'][l], p['spec_i'][l])
        x2 = jnp.einsum('bis,io->bos', x, p['w_conv'][l]) \
            + p['b_conv'][l][None, :, None]
        x = x1 + x2
        if l < 3:
            x = jax.nn.gelu(x, approximate=False)
    x = jnp.transpose(x, (0, 2, 1))
    x = jax.nn.gelu(x @ p['fc1_w'] + p['fc1_b'], approximate=False)
    x = x @ p['fc2_w'] + p['fc2_b']
    return x


if __name__ == "__main__":
    B, S, width, modes = 2, 16, 32, 16
    key = jax.random.PRNGKey(0)
    k_x, k_p = jax.random.split(key)
    x_in = jax.random.normal(k_x, (B, S, 1), jnp.float32)

    params, K = init_params(k_p, width, S, modes)
    bases = make_dft_bases(S, K)
    ref = jax.block_until_ready(fno1d_forward_ref(x_in, params))

    # 1) f32 operators: strict validation of the fused-kernel math.
    ops_f32 = build_fused_operands(params, S, bases, weight_dtype=jnp.float32)
    out_f32 = jax.block_until_ready(fno1d_forward_pallas(x_in, ops_f32))
    np.testing.assert_allclose(np.asarray(out_f32), np.asarray(ref),
                               rtol=2e-3, atol=3e-4)

    # 2) bf16 large operators (the HBM-byte-optimized deployment path):
    #    only weight quantization error; activations/accumulation stay f32.
    ops_bf16 = build_fused_operands(params, S, bases, weight_dtype=jnp.bfloat16)
    out_bf16 = jax.block_until_ready(fno1d_forward_pallas(x_in, ops_bf16))
    np.testing.assert_allclose(np.asarray(out_bf16), np.asarray(ref),
                               rtol=5e-2, atol=1e-2)

    print("KERNEL_OK")
</pallas_src>

<mosaic_0001>
module attributes {stable_mosaic.version = 11 : i64} {
  func.func @_fno1d_kernel(%arg0: i32, %arg1: i32, %arg2: memref<8x16xf32, #tpu.memory_space<vmem>>, %arg3: memref<16x512xf32, #tpu.memory_space<vmem>>, %arg4: memref<1x512xf32, #tpu.memory_space<vmem>>, %arg5: memref<1x512x512xf32, #tpu.memory_space<vmem>>, %arg6: memref<1x1x512xf32, #tpu.memory_space<vmem>>, %arg7: memref<32x128xf32, #tpu.memory_space<vmem>>, %arg8: memref<1x128xf32, #tpu.memory_space<vmem>>, %arg9: memref<1x128xf32, #tpu.memory_space<vmem>>, %arg10: memref<1x1xf32, #tpu.memory_space<vmem>>, %arg11: memref<8x16xf32, #tpu.memory_space<vmem>>, %arg12: memref<8x512xf32, #tpu.memory_space<vmem>>) attributes {dimension_semantics = [#tpu.dimension_semantics<parallel>, #tpu.dimension_semantics<arbitrary>], iteration_bounds = array<i64: 1, 4>, scalar_prefetch = 0 : i64, scratch_operands = 1 : i64, tpu.core_type = #tpu.core_type<tc>, window_params = [{transform_indices = @transform_0, window_bounds = array<i64: 8, 16>}, {pipeline_mode = #tpu.pipeline_mode<synchronous>, transform_indices = @transform_1, window_bounds = array<i64: 16, 512>}, {pipeline_mode = #tpu.pipeline_mode<synchronous>, transform_indices = @transform_2, window_bounds = array<i64: 1, 512>}, {transform_indices = @transform_3, window_bounds = array<i64: 1, 512, 512>}, {transform_indices = @transform_4, window_bounds = array<i64: 1, 1, 512>}, {pipeline_mode = #tpu.pipeline_mode<synchronous>, transform_indices = @transform_5, window_bounds = array<i64: 32, 128>}, {pipeline_mode = #tpu.pipeline_mode<synchronous>, transform_indices = @transform_6, window_bounds = array<i64: 1, 128>}, {pipeline_mode = #tpu.pipeline_mode<synchronous>, transform_indices = @transform_7, window_bounds = array<i64: 1, 128>}, {pipeline_mode = #tpu.pipeline_mode<synchronous>, transform_indices = @transform_8, window_bounds = array<i64: 1, 1>}, {transform_indices = @transform_9, window_bounds = array<i64: 8, 16>}]} {
    %c0_i32 = arith.constant 0 : i32
    %0 = arith.cmpi eq, %arg1, %c0_i32 : i32
    %1 = arith.extui %0 : i1 to i32
    %c0_i32_0 = arith.constant 0 : i32
    %2 = arith.cmpi ne, %1, %c0_i32_0 : i32
    scf.if %2 {
      %c0_11 = arith.constant 0 : index
      %c0_12 = arith.constant 0 : index
      %17 = vector.load %arg2[%c0_11, %c0_12] : memref<8x16xf32, #tpu.memory_space<vmem>>, vector<8x16xf32>
      %c0_13 = arith.constant 0 : index
      %c0_14 = arith.constant 0 : index
      %18 = vector.load %arg3[%c0_13, %c0_14] : memref<16x512xf32, #tpu.memory_space<vmem>>, vector<16x512xf32>
      %cst_15 = arith.constant dense<0.000000e+00> : vector<8x512xf32>
      %19 = tpu.matmul %17, %18, %cst_15 {dimension_numbers = #tpu.dot_dimension_numbers<[1], [0], [0], [1], [0, 0, 1, 1], [], []>} : vector<8x16xf32>, vector<16x512xf32>, vector<8x512xf32> -> vector<8x512xf32>
      %c0_16 = arith.constant 0 : index
      %c0_17 = arith.constant 0 : index
      %20 = vector.load %arg4[%c0_16, %c0_17] : memref<1x512xf32, #tpu.memory_space<vmem>>, vector<1x512xf32>
      %21 = vector.broadcast %20 : vector<1x512xf32> to vector<8x512xf32>
      %22 = arith.addf %19, %21 : vector<8x512xf32>
      %c0_18 = arith.constant 0 : index
      %c0_19 = arith.constant 0 : index
      %23 = vector.load %arg12[%c0_18, %c0_19] : memref<8x512xf32, #tpu.memory_space<vmem>>, vector<8x512xf32>
      tpu.vector_store %arg12[%c0_18, %c0_19], %22 {strides = array<i32>} : memref<8x512xf32, #tpu.memory_space<vmem>>, vector<8x512xf32>,
    } else {
    }
    %c0 = arith.constant 0 : index
    %c0_1 = arith.constant 0 : index
    %3 = vector.load %arg12[%c0, %c0_1] : memref<8x512xf32, #tpu.memory_space<vmem>>, vector<8x512xf32>
    %c0_2 = arith.constant 0 : index
    %c0_3 = arith.constant 0 : index
    %c0_4 = arith.constant 0 : index
    %4 = vector.load %arg5[%c0_2, %c0_3, %c0_4] : memref<1x512x512xf32, #tpu.memory_space<vmem>>, vector<1x512x512xf32>
    %5 = vector.shape_cast %4 : vector<1x512x512xf32> to vector<512x512xf32>
    %cst = arith.constant dense<0.000000e+00> : vector<8x512xf32>
    %6 = tpu.matmul %3, %5, %cst {dimension_numbers = #tpu.dot_dimension_numbers<[1], [0], [0], [1], [0, 0, 1, 1], [], []>} : vector<8x512xf32>, vector<512x512xf32>, vector<8x512xf32> -> vector<8x512xf32>
    %c0_5 = arith.constant 0 : index
    %c0_6 = arith.constant 0 : index
    %c0_7 = arith.constant 0 : index
    %7 = vector.load %arg6[%c0_5, %c0_6, %c0_7] : memref<1x1x512xf32, #tpu.memory_space<vmem>>, vector<1x1x512xf32>
    %8 = vector.shape_cast %7 : vector<1x1x512xf32> to vector<1x512xf32>
    %9 = vector.broadcast %8 : vector<1x512xf32> to vector<8x512xf32>
    %10 = arith.addf %6, %9 : vector<8x512xf32>
    %c3_i32 = arith.constant 3 : i32
    %11 = arith.cmpi slt, %arg1, %c3_i32 : i32
    %12 = arith.extui %11 : i1 to i32
    %c0_i32_8 = arith.constant 0 : i32
    %13 = arith.cmpi ne, %12, %c0_i32_8 : i32
    scf.if %13 {
      %cst_11 = arith.constant 5.000000e-01 : f32
      %17 = vector.broadcast %cst_11 : f32 to vector<8x512xf32>
      %18 = arith.mulf %17, %10 : vector<8x512xf32>
      %cst_12 = arith.constant 0.707106769 : f32
      %19 = vector.broadcast %cst_12 : f32 to vector<8x512xf32>
      %20 = arith.mulf %10, %19 : vector<8x512xf32>
      %21 = math.absf %20 : vector<8x512xf32>
      %cst_13 = arith.constant 0.327591091 : f32
      %22 = vector.broadcast %cst_13 : f32 to vector<8x512xf32>
      %23 = arith.mulf %22, %21 : vector<8x512xf32>
      %cst_14 = arith.constant 1.000000e+00 : f32
      %24 = vector.broadcast %cst_14 : f32 to vector<8x512xf32>
      %25 = arith.addf %24, %23 : vector<8x512xf32>
      %26 = tpu.reciprocal %25 : vector<8x512xf32> -> vector<8x512xf32>
      %cst_15 = arith.constant 1.06140542 : f32
      %27 = vector.broadcast %cst_15 : f32 to vector<8x512xf32>
      %28 = arith.mulf %27, %26 : vector<8x512xf32>
      %cst_16 = arith.constant 1.45315206 : f32
      %29 = vector.broadcast %cst_16 : f32 to vector<8x512xf32>
      %30 = arith.subf %28, %29 : vector<8x512xf32>
      %31 = arith.mulf %30, %26 : vector<8x512xf32>
      %cst_17 = arith.constant 1.42141378 : f32
      %32 = vector.broadcast %cst_17 : f32 to vector<8x512xf32>
      %33 = arith.addf %31, %32 : vector<8x512xf32>
      %34 = arith.mulf %33, %26 : vector<8x512xf32>
      %cst_18 = arith.constant 0.284496725 : f32
      %35 = vector.broadcast %cst_18 : f32 to vector<8x512xf32>
      %36 = arith.subf %34, %35 : vector<8x512xf32>
      %37 = arith.mulf %36, %26 : vector<8x512xf32>
      %cst_19 = arith.constant 0.254829586 : f32
      %38 = vector.broadcast %cst_19 : f32 to vector<8x512xf32>
      %39 = arith.addf %37, %38 : vector<8x512xf32>
      %40 = arith.mulf %39, %26 : vector<8x512xf32>
      %cst_20 = arith.constant 0.000000e+00 : f32
      %41 = vector.broadcast %cst_20 : f32 to vector<8x512xf32>
      %42 = arith.subf %41, %21 : vector<8x512xf32>
      %43 = arith.mulf %42, %21 : vector<8x512xf32>
      %44 = math.exp %43 : vector<8x512xf32>
      %45 = arith.mulf %40, %44 : vector<8x512xf32>
      %cst_21 = arith.constant 1.000000e+00 : f32
      %46 = vector.broadcast %cst_21 : f32 to vector<8x512xf32>
      %47 = arith.subf %46, %45 : vector<8x512xf32>
      %cst_22 = arith.constant 0.000000e+00 : f32
      %48 = vector.broadcast %cst_22 : f32 to vector<8x512xf32>
      %49 = arith.cmpf oge, %20, %48 : vector<8x512xf32>
      %cst_23 = arith.constant 0.000000e+00 : f32
      %50 = vector.broadcast %cst_23 : f32 to vector<8x512xf32>
      %51 = arith.subf %50, %47 : vector<8x512xf32>
      %52 = arith.select %49, %47, %51 : vector<8x512xi1>, vector<8x512xf32>
      %cst_24 = arith.constant 1.000000e+00 : f32
      %53 = vector.broadcast %cst_24 : f32 to vector<8x512xf32>
      %54 = arith.addf %53, %52 : vector<8x512xf32>
      %55 = arith.mulf %18, %54 : vector<8x512xf32>
      %c0_25 = arith.constant 0 : index
      %c0_26 = arith.constant 0 : index
      %56 = vector.load %arg12[%c0_25, %c0_26] : memref<8x512xf32, #tpu.memory_space<vmem>>, vector<8x512xf32>
      tpu.vector_store %arg12[%c0_25, %c0_26], %55 {strides = array<i32>} : memref<8x512xf32, #tpu.memory_space<vmem>>, vector<8x512xf32>,
    } else {
    }
    %c3_i32_9 = arith.constant 3 : i32
    %14 = arith.cmpi eq, %arg1, %c3_i32_9 : i32
    %15 = arith.extui %14 : i1 to i32
    %c0_i32_10 = arith.constant 0 : i32
    %16 = arith.cmpi ne, %15, %c0_i32_10 : i32
    scf.if %16 {
      %17 = vector.extract_strided_slice %10 {offsets = [0, 0], sizes = [8, 32], strides = [1, 1]} : vector<8x512xf32> to vector<8x32xf32>
      %18 = vector.extract_strided_slice %10 {offsets = [0, 32], sizes = [8, 32], strides = [1, 1]} : vector<8x512xf32> to vector<8x32xf32>
      %19 = vector.extract_strided_slice %10 {offsets = [0, 64], sizes = [8, 32], strides = [1, 1]} : vector<8x512xf32> to vector<8x32xf32>
      %20 = vector.extract_strided_slice %10 {offsets = [0, 96], sizes = [8, 32], strides = [1, 1]} : vector<8x512xf32> to vector<8x32xf32>
      %21 = vector.extract_strided_slice %10 {offsets = [0, 128], sizes = [8, 32], strides = [1, 1]} : vector<8x512xf32> to vector<8x32xf32>
      %22 = vector.extract_strided_slice %10 {offsets = [0, 160], sizes = [8, 32], strides = [1, 1]} : vector<8x512xf32> to vector<8x32xf32>
      %23 = vector.extract_strided_slice %10 {offsets = [0, 192], sizes = [8, 32], strides = [1, 1]} : vector<8x512xf32> to vector<8x32xf32>
      %24 = vector.extract_strided_slice %10 {offsets = [0, 224], sizes = [8, 32], strides = [1, 1]} : vector<8x512xf32> to vector<8x32xf32>
      %25 = vector.extract_strided_slice %10 {offsets = [0, 256], sizes = [8, 32], strides = [1, 1]} : vector<8x512xf32> to vector<8x32xf32>
      %26 = vector.extract_strided_slice %10 {offsets = [0, 288], sizes = [8, 32], strides = [1, 1]} : vector<8x512xf32> to vector<8x32xf32>
      %27 = vector.extract_strided_slice %10 {offsets = [0, 320], sizes = [8, 32], strides = [1, 1]} : vector<8x512xf32> to vector<8x32xf32>
      %28 = vector.extract_strided_slice %10 {offsets = [0, 352], sizes = [8, 32], strides = [1, 1]} : vector<8x512xf32> to vector<8x32xf32>
      %29 = vector.extract_strided_slice %10 {offsets = [0, 384], sizes = [8, 32], strides = [1, 1]} : vector<8x512xf32> to vector<8x32xf32>
      %30 = vector.extract_strided_slice %10 {offsets = [0, 416], sizes = [8, 32], strides = [1, 1]} : vector<8x512xf32> to vector<8x32xf32>
      %31 = vector.extract_strided_slice %10 {offsets = [0, 448], sizes = [8, 32], strides = [1, 1]} : vector<8x512xf32> to vector<8x32xf32>
      %32 = vector.extract_strided_slice %10 {offsets = [0, 480], sizes = [8, 32], strides = [1, 1]} : vector<8x512xf32> to vector<8x32xf32>
      %33 = tpu.concatenate %17, %18, %19, %20, %21, %22, %23, %24, %25, %26, %27, %28, %29, %30, %31, %32 in 0 : vector<8x32xf32>, vector<8x32xf32>, vector<8x32xf32>, vector<8x32xf32>, vector<8x32xf32>, vector<8x32xf32>, vector<8x32xf32>, vector<8x32xf32>, vector<8x32xf32>, vector<8x32xf32>, vector<8x32xf32>, vector<8x32xf32>, vector<8x32xf32>, vector<8x32xf32>, vector<8x32xf32>, vector<8x32xf32> -> vector<128x32xf32>
      %c0_11 = arith.constant 0 : index
      %c0_12 = arith.constant 0 : index
      %34 = vector.load %arg7[%c0_11, %c0_12] : memref<32x128xf32, #tpu.memory_space<vmem>>, vector<32x128xf32>
      %cst_13 = arith.constant dense<0.000000e+00> : vector<128x128xf32>
      %35 = tpu.matmul %33, %34, %cst_13 {dimension_numbers = #tpu.dot_dimension_numbers<[1], [0], [0], [1], [0, 0, 1, 1], [], []>} : vector<128x32xf32>, vector<32x128xf32>, vector<128x128xf32> -> vector<128x128xf32>
      %c0_14 = arith.constant 0 : index
      %c0_15 = arith.constant 0 : index
      %36 = vector.load %arg8[%c0_14, %c0_15] : memref<1x128xf32, #tpu.memory_space<vmem>>, vector<1x128xf32>
      %37 = vector.broadcast %36 : vector<1x128xf32> to vector<128x128xf32>
      %38 = arith.addf %35, %37 : vector<128x128xf32>
      %cst_16 = arith.constant 5.000000e-01 : f32
      %39 = vector.broadcast %cst_16 : f32 to vector<128x128xf32>
      %40 = arith.mulf %39, %38 : vector<128x128xf32>
      %cst_17 = arith.constant 0.707106769 : f32
      %41 = vector.broadcast %cst_17 : f32 to vector<128x128xf32>
      %42 = arith.mulf %38, %41 : vector<128x128xf32>
      %43 = math.absf %42 : vector<128x128xf32>
      %cst_18 = arith.constant 0.327591091 : f32
      %44 = vector.broadcast %cst_18 : f32 to vector<128x128xf32>
      %45 = arith.mulf %44, %43 : vector<128x128xf32>
      %cst_19 = arith.constant 1.000000e+00 : f32
      %46 = vector.broadcast %cst_19 : f32 to vector<128x128xf32>
      %47 = arith.addf %46, %45 : vector<128x128xf32>
      %48 = tpu.reciprocal %47 : vector<128x128xf32> -> vector<128x128xf32>
      %cst_20 = arith.constant 1.06140542 : f32
      %49 = vector.broadcast %cst_20 : f32 to vector<128x128xf32>
      %50 = arith.mulf %49, %48 : vector<128x128xf32>
      %cst_21 = arith.constant 1.45315206 : f32
      %51 = vector.broadcast %cst_21 : f32 to vector<128x128xf32>
      %52 = arith.subf %50, %51 : vector<128x128xf32>
      %53 = arith.mulf %52, %48 : vector<128x128xf32>
      %cst_22 = arith.constant 1.42141378 : f32
      %54 = vector.broadcast %cst_22 : f32 to vector<128x128xf32>
      %55 = arith.addf %53, %54 : vector<128x128xf32>
      %56 = arith.mulf %55, %48 : vector<128x128xf32>
      %cst_23 = arith.constant 0.284496725 : f32
      %57 = vector.broadcast %cst_23 : f32 to vector<128x128xf32>
      %58 = arith.subf %56, %57 : vector<128x128xf32>
      %59 = arith.mulf %58, %48 : vector<128x128xf32>
      %cst_24 = arith.constant 0.254829586 : f32
      %60 = vector.broadcast %cst_24 : f32 to vector<128x128xf32>
      %61 = arith.addf %59, %60 : vector<128x128xf32>
      %62 = arith.mulf %61, %48 : vector<128x128xf32>
      %cst_25 = arith.constant 0.000000e+00 : f32
      %63 = vector.broadcast %cst_25 : f32 to vector<128x128xf32>
      %64 = arith.subf %63, %43 : vector<128x128xf32>
      %65 = arith.mulf %64, %43 : vector<128x128xf32>
      %66 = math.exp %65 : vector<128x128xf32>
      %67 = arith.mulf %62, %66 : vector<128x128xf32>
      %cst_26 = arith.constant 1.000000e+00 : f32
      %68 = vector.broadcast %cst_26 : f32 to vector<128x128xf32>
      %69 = arith.subf %68, %67 : vector<128x128xf32>
      %cst_27 = arith.constant 0.000000e+00 : f32
      %70 = vector.broadcast %cst_27 : f32 to vector<128x128xf32>
      %71 = arith.cmpf oge, %42, %70 : vector<128x128xf32>
      %cst_28 = arith.constant 0.000000e+00 : f32
      %72 = vector.broadcast %cst_28 : f32 to vector<128x128xf32>
      %73 = arith.subf %72, %69 : vector<128x128xf32>
      %74 = arith.select %71, %69, %73 : vector<128x128xi1>, vector<128x128xf32>
      %cst_29 = arith.constant 1.000000e+00 : f32
      %75 = vector.broadcast %cst_29 : f32 to vector<128x128xf32>
      %76 = arith.addf %75, %74 : vector<128x128xf32>
      %77 = arith.mulf %40, %76 : vector<128x128xf32>
      %c0_30 = arith.constant 0 : index
      %c0_31 = arith.constant 0 : index
      %78 = vector.load %arg9[%c0_30, %c0_31] : memref<1x128xf32, #tpu.memory_space<vmem>>, vector<1x128xf32>
      %79 = vector.broadcast %78 : vector<1x128xf32> to vector<128x128xf32>
      %80 = arith.mulf %77, %79 : vector<128x128xf32>
      %cst_32 = arith.constant dense<0.000000e+00> : vector<128xf32>
      %81 = vector.multi_reduction <add>, %80, %cst_32 [1] : vector<128x128xf32> to vector<128xf32>
      %82 = vector.shape_cast %81 : vector<128xf32> to vector<128x1xf32>
      %83 = vector.extract_strided_slice %82 {offsets = [0, 0], sizes = [8, 1], strides = [1, 1]} : vector<128x1xf32> to vector<8x1xf32>
      %84 = vector.extract_strided_slice %82 {offsets = [8, 0], sizes = [8, 1], strides = [1, 1]} : vector<128x1xf32> to vector<8x1xf32>
      %85 = vector.extract_strided_slice %82 {offsets = [16, 0], sizes = [8, 1], strides = [1, 1]} : vector<128x1xf32> to vector<8x1xf32>
      %86 = vector.extract_strided_slice %82 {offsets = [24, 0], sizes = [8, 1], strides = [1, 1]} : vector<128x1xf32> to vector<8x1xf32>
      %87 = vector.extract_strided_slice %82 {offsets = [32, 0], sizes = [8, 1], strides = [1, 1]} : vector<128x1xf32> to vector<8x1xf32>
      %88 = vector.extract_strided_slice %82 {offsets = [40, 0], sizes = [8, 1], strides = [1, 1]} : vector<128x1xf32> to vector<8x1xf32>
      %89 = vector.extract_strided_slice %82 {offsets = [48, 0], sizes = [8, 1], strides = [1, 1]} : vector<128x1xf32> to vector<8x1xf32>
      %90 = vector.extract_strided_slice %82 {offsets = [56, 0], sizes = [8, 1], strides = [1, 1]} : vector<128x1xf32> to vector<8x1xf32>
      %91 = vector.extract_strided_slice %82 {offsets = [64, 0], sizes = [8, 1], strides = [1, 1]} : vector<128x1xf32> to vector<8x1xf32>
      %92 = vector.extract_strided_slice %82 {offsets = [72, 0], sizes = [8, 1], strides = [1, 1]} : vector<128x1xf32> to vector<8x1xf32>
      %93 = vector.extract_strided_slice %82 {offsets = [80, 0], sizes = [8, 1], strides = [1, 1]} : vector<128x1xf32> to vector<8x1xf32>
      %94 = vector.extract_strided_slice %82 {offsets = [88, 0], sizes = [8, 1], strides = [1, 1]} : vector<128x1xf32> to vector<8x1xf32>
      %95 = vector.extract_strided_slice %82 {offsets = [96, 0], sizes = [8, 1], strides = [1, 1]} : vector<128x1xf32> to vector<8x1xf32>
      %96 = vector.extract_strided_slice %82 {offsets = [104, 0], sizes = [8, 1], strides = [1, 1]} : vector<128x1xf32> to vector<8x1xf32>
      %97 = vector.extract_strided_slice %82 {offsets = [112, 0], sizes = [8, 1], strides = [1, 1]} : vector<128x1xf32> to vector<8x1xf32>
      %98 = vector.extract_strided_slice %82 {offsets = [120, 0], sizes = [8, 1], strides = [1, 1]} : vector<128x1xf32> to vector<8x1xf32>
      %99 = tpu.concatenate %83, %84, %85, %86, %87, %88, %89, %90, %91, %92, %93, %94, %95, %96, %97, %98 in 1 : vector<8x1xf32>, vector<8x1xf32>, vector<8x1xf32>, vector<8x1xf32>, vector<8x1xf32>, vector<8x1xf32>, vector<8x1xf32>, vector<8x1xf32>, vector<8x1xf32>, vector<8x1xf32>, vector<8x1xf32>, vector<8x1xf32>, vector<8x1xf32>, vector<8x1xf32>, vector<8x1xf32>, vector<8x1xf32> -> vector<8x16xf32>
      %c0_33 = arith.constant 0 : index
      %c0_34 = arith.constant 0 : index
      %100 = vector.load %arg10[%c0_33, %c0_34] : memref<1x1xf32, #tpu.memory_space<vmem>>, vector<1x1xf32>
      %101 = vector.broadcast %100 : vector<1x1xf32> to vector<8x16xf32>
      %102 = arith.addf %99, %101 : vector<8x16xf32>
      %c0_35 = arith.constant 0 : index
      %c0_36 = arith.constant 0 : index
      %103 = vector.load %arg11[%c0_35, %c0_36] : memref<8x16xf32, #tpu.memory_space<vmem>>, vector<8x16xf32>
      tpu.vector_store %arg11[%c0_35, %c0_36], %102 {strides = array<i32>} : memref<8x16xf32, #tpu.memory_space<vmem>>, vector<8x16xf32>,
    } else {
    }
    return
  }
  func.func @transform_0(%arg0: i32, %arg1: i32) -> (i32, i32) {
    %c0_i32 = arith.constant 0 : i32
    %c0_i32_0 = arith.constant 0 : i32
    return %arg0, %c0_i32 : i32, i32
  }
  func.func @transform_1(%arg0: i32, %arg1: i32) -> (i32, i32) {
    %c0_i32 = arith.constant 0 : i32
    %c0_i32_0 = arith.constant 0 : i32
    %c0_i32_1 = arith.constant 0 : i32
    return %c0_i32, %c0_i32_0 : i32, i32
  }
  func.func @transform_2(%arg0: i32, %arg1: i32) -> (i32, i32) {
    %c0_i32 = arith.constant 0 : i32
    %c0_i32_0 = arith.constant 0 : i32
    %c0_i32_1 = arith.constant 0 : i32
    return %c0_i32, %c0_i32_0 : i32, i32
  }
  func.func @transform_3(%arg0: i32, %arg1: i32) -> (i32, i32, i32) {
    %c0_i32 = arith.constant 0 : i32
    %c0_i32_0 = arith.constant 0 : i32
    %c0_i32_1 = arith.constant 0 : i32
    return %arg1, %c0_i32, %c0_i32_0 : i32, i32, i32
  }
  func.func @transform_4(%arg0: i32, %arg1: i32) -> (i32, i32, i32) {
    %c0_i32 = arith.constant 0 : i32
    %c0_i32_0 = arith.constant 0 : i32
    %c0_i32_1 = arith.constant 0 : i32
    return %arg1, %c0_i32, %c0_i32_0 : i32, i32, i32
  }
  func.func @transform_5(%arg0: i32, %arg1: i32) -> (i32, i32) {
    %c0_i32 = arith.constant 0 : i32
    %c0_i32_0 = arith.constant 0 : i32
    %c0_i32_1 = arith.constant 0 : i32
    return %c0_i32, %c0_i32_0 : i32, i32
  }
  func.func @transform_6(%arg0: i32, %arg1: i32) -> (i32, i32) {
    %c0_i32 = arith.constant 0 : i32
    %c0_i32_0 = arith.constant 0 : i32
    %c0_i32_1 = arith.constant 0 : i32
    return %c0_i32, %c0_i32_0 : i32, i32
  }
  func.func @transform_7(%arg0: i32, %arg1: i32) -> (i32, i32) {
    %c0_i32 = arith.constant 0 : i32
    %c0_i32_0 = arith.constant 0 : i32
    %c0_i32_1 = arith.constant 0 : i32
    return %c0_i32, %c0_i32_0 : i32, i32
  }
  func.func @transform_8(%arg0: i32, %arg1: i32) -> (i32, i32) {
    %c0_i32 = arith.constant 0 : i32
    %c0_i32_0 = arith.constant 0 : i32
    %c0_i32_1 = arith.constant 0 : i32
    return %c0_i32, %c0_i32_0 : i32, i32
  }
  func.func @transform_9(%arg0: i32, %arg1: i32) -> (i32, i32) {
    %c0_i32 = arith.constant 0 : i32
    %c0_i32_0 = arith.constant 0 : i32
    return %arg0, %c0_i32 : i32, i32
  }
}

</mosaic_0001>

<llo_original>
// kernel: tpu_custom_call.1
$region0: #{tpu_custom_call.1}
  #allocation0 [shape = 'u32[]', space=smem, size = 0x4, offset = 0x4, fixed_abs, tag = 'smem constant byte address 0x4 - core index']
  #allocation1 [shape = 'u32[72,128]{1,0:T(1,128)}', space=vmem, size = 0x9000, scoped, tag = 'internal scratch']
  #allocation2 [shape = 'f32[8,512]{1,0:T(8,128)}', space=vmem, size = 0x4000, scoped, tag = 'scratch operand']
  #allocation3 [shape = 'f32[1,1]{1,0:T(1,128)S(1)}', space=vmem, size = 0x200, scoped, tag = 'scoped memory for tpu_custom_call.1']
  %s0 = inlined_call_operand.hbm [shape: f32[8,16], index: 0, kind: input, shape index: {}]
  %s1 = inlined_call_operand.hbm [shape: f32[16,512], index: 1, kind: input, shape index: {}]
  %s2 = inlined_call_operand.hbm [shape: f32[1,512], index: 2, kind: input, shape index: {}]
  %s3 = inlined_call_operand.hbm [shape: f32[4,512,512], index: 3, kind: input, shape index: {}]
  %s4 = inlined_call_operand.hbm [shape: f32[4,1,512], index: 4, kind: input, shape index: {}]
  %s5 = inlined_call_operand.hbm [shape: f32[32,128], index: 5, kind: input, shape index: {}]
  %s6 = inlined_call_operand.hbm [shape: f32[1,128], index: 6, kind: input, shape index: {}]
  %s7 = inlined_call_operand.hbm [shape: f32[1,128], index: 7, kind: input, shape index: {}]
  %s8 = inlined_call_operand.<no memory space> [shape: f32[1,1], index: 8, kind: input, shape index: {}]
  %s9 = inlined_call_operand.hbm [shape: f32[8,16], index: 9, kind: output, shape index: {}]
  %s10 = sld [smem:[#allocation0]]
  $region113: #{tpu_custom_call.1} parent=0
    _
  %s12 = ssub.s32 1, %s10
  %s13 = scalar_select 0, %s12, %s10
  %v14 = vstv %s8
  %15 = vst [vmem:[#allocation3] sm:$0x1] %v14
  $region1: #{tpu_custom_call.1} parent=0
    #allocation4 [shape = 'u8[4096]{0}', space=vmem, size = 0x1000, scoped, tag = 'input window, operand 0, single buffered']
    #allocation5 [shape = 's32[2]{0}', space=sflag, size = 0x8, scoped, tag = 'scoped memory for tpu_custom_call.1']
    #allocation6 [shape = 's32[2]{0}', space=sflag, size = 0x8, scoped, tag = 'scoped memory for tpu_custom_call.1']
    #allocation7 [shape = 'u8[32768]{0}', space=vmem, size = 0x8000, scoped, tag = 'input window, operand 1, single buffered']
    #allocation8 [shape = 's32[1]{0}', space=sflag, size = 0x4, scoped, tag = 'scoped memory for tpu_custom_call.1']
    #allocation9 [shape = 'u8[2048]{0}', space=vmem, size = 0x800, scoped, tag = 'input window, operand 2, single buffered']
    #allocation10 [shape = 'u8[2097152]{0}', space=vmem, size = 0x200000, scoped, tag = 'input window, operand 3']
    #allocation11 [shape = 's32[2]{0}', space=sflag, size = 0x8, scoped, tag = 'scoped memory for tpu_custom_call.1']
    #allocation12 [shape = 'u8[4096]{0}', space=vmem, size = 0x1000, scoped, tag = 'input window, operand 4']
    #allocation13 [shape = 'u8[16384]{0}', space=vmem, size = 0x4000, scoped, tag = 'input window, operand 5, single buffered']
    #allocation14 [shape = 's32[1]{0}', space=sflag, size = 0x4, scoped, tag = 'scoped memory for tpu_custom_call.1']
    #allocation15 [shape = 'u8[512]{0}', space=vmem, size = 0x400, scoped, tag = 'input window, operand 6, single buffered']
    #allocation16 [shape = 'u8[512]{0}', space=vmem, size = 0x400, scoped, tag = 'input window, operand 7, single buffered']
    #allocation17 [shape = 's32[1]{0}', space=sflag, size = 0x4, scoped, tag = 'scoped memory for tpu_custom_call.1']
    #allocation18 [shape = 'u8[4096]{0}', space=vmem, size = 0x1000, scoped, tag = 'output window, operand 0, single buffered']
    %16 = vsyncpa [#allocation5], 0
    %17 = vsyncpa [#allocation8], 0
    %18 = vsyncpa [#allocation11], 0
    %s19 = scalar_lea.sflag [#allocation11], 1
    %20 = vsyncpa %s19, 0
    %21 = vsyncpa [#allocation14], 0
    %22 = vsyncpa [#allocation17], 0
    %23 = vsyncpa [#allocation6], 0
    loop: start=0, step=1, limit=6
    $region2: #{tpu_custom_call.1} parent=1 // loop_pre_header
      _
    $region3: #{tpu_custom_call.1} parent=1 // loop_header
      %s25 = sphi 0, %s29
      %p26 = scmp.ge.s32.totalorder %s25, 6
      %s32 = sphi 0, %s44
      %s33 = sphi 0, %s40
      %s34 = sphi 0, %s32
      %s35 = sphi 0, %s33
      %s36 = sphi 0, %s34
      %s37 = sphi 0, %s35
      %s47 = sphi 0, %s49
      %s50 = sphi 0, %s47
      %s51 = sphi 0, %s50
      %s67 = sphi 0, %s51
      %s71 = sphi 0, %s71
      %s73 = sphi 0, %s71
      %s74 = sphi 0, %s73
      %s88 = sphi 0, %s74
      %s92 = sphi 0, %s92
      %s94 = sphi 0, %s92
      %s95 = sphi 0, %s94
      %s109 = sphi 0, %s95
      %s115 = sphi 0, %s117
      %s118 = sphi 0, %s115
      %s119 = sphi 0, %s118
      %s135 = sphi 0, %s119
      %s141 = sphi 0, %s143
      %s144 = sphi 0, %s141
      %s145 = sphi 0, %s144
      %s161 = sphi 0, %s145
      %s165 = sphi 0, %s165
      %s167 = sphi 0, %s165
      %s168 = sphi 0, %s167
      %s182 = sphi 0, %s168
      %s186 = sphi 0, %s186
      %s188 = sphi 0, %s186
      %s189 = sphi 0, %s188
      %s203 = sphi 0, %s189
      %s207 = sphi 0, %s207
      %s209 = sphi 0, %s207
      %s210 = sphi 0, %s209
      %s224 = sphi 0, %s210
      %s228 = sphi 0, %s228
      %s230 = sphi 0, %s228
      %s231 = sphi 0, %s230
      %s245 = sphi 0, %s231
      %s251 = sphi 0, %s253
      %s254 = sphi 0, %s251
      %s255 = sphi 0, %s254
      %s271 = sphi 0, %s255
    $region4: #{tpu_custom_call.1} parent=1 // loop_header_branch
      %28 = sbr.rel (%p26) target = $region8
    $region5: #{tpu_custom_call.1} parent=1 // loop_body
      %s30 = ssub.s32 %s25, 1
      %s31 = ssub.s32 %s25, 2
      %s38 = sadd.s32 1, %s33
      %p39 = scmp.ge.s32.totalorder %s38, 4
      %s40 = scalar_select %p39, 0, %s38
      %s41 = sadd.s32 1, %s32
      %s42 = scalar_select %p39, %s41, %s32
      %p43 = scmp.ge.s32.totalorder %s42, 1
      %s44 = scalar_select %p43, 0, %s42
      %s45 = ssub.s32 %s32, %s44
      %p46 = scmp.eq.s32.totalorder %s45, 0
      %s48 = sadd.s32 %s47, 1
      %s49 = scalar_select %p46, %s47, %s48
      %p52 = pneg %p46
      %p53 = scmp.eq.s32.totalorder %s25, 3
      %p54 = por %p52, %p53
      %p55 = scmp.ne.s32.totalorder %s47, %s50
      %p56 = scmp.eq.s32.totalorder %s25, 0
      %p57 = por %p55, %p56
      %p58 = scmp.ne.s32.totalorder %s47, %s50
      %p59 = scmp.eq.s32.totalorder %s30, 3
      %p60 = por %p58, %p59
      %p61 = scmp.ne.s32.totalorder %s50, %s51
      %p62 = scmp.eq.s32.totalorder %s30, 0
      %p63 = por %p61, %p62
      %p64 = scmp.ne.s32.totalorder %s50, %s51
      %p65 = scmp.eq.s32.totalorder %s31, 3
      %p66 = por %p64, %p65
      %p68 = scmp.ne.s32.totalorder %s51, %s67
      %p69 = scmp.eq.s32.totalorder %s31, 0
      %p70 = por %p68, %p69
      %s72 = sadd.s32 %s71, 1
      %p75 = scmp.eq.s32.totalorder %s25, 3
      %p76 = scmp.ne.s32.totalorder %s71, %s73
      %p77 = scmp.eq.s32.totalorder %s25, 0
      %p78 = por %p76, %p77
      %p79 = scmp.ne.s32.totalorder %s71, %s73
      %p80 = scmp.eq.s32.totalorder %s30, 3
      %p81 = por %p79, %p80
      %p82 = scmp.ne.s32.totalorder %s73, %s74
      %p83 = scmp.eq.s32.totalorder %s30, 0
      %p84 = por %p82, %p83
      %p85 = scmp.ne.s32.totalorder %s73, %s74
      %p86 = scmp.eq.s32.totalorder %s31, 3
      %p87 = por %p85, %p86
      %p89 = scmp.ne.s32.totalorder %s74, %s88
      %p90 = scmp.eq.s32.totalorder %s31, 0
      %p91 = por %p89, %p90
      %s93 = sadd.s32 %s92, 1
      %p96 = scmp.eq.s32.totalorder %s25, 3
      %p97 = scmp.ne.s32.totalorder %s92, %s94
      %p98 = scmp.eq.s32.totalorder %s25, 0
      %p99 = por %p97, %p98
      %p100 = scmp.ne.s32.totalorder %s92, %s94
      %p101 = scmp.eq.s32.totalorder %s30, 3
      %p102 = por %p100, %p101
      %p103 = scmp.ne.s32.totalorder %s94, %s95
      %p104 = scmp.eq.s32.totalorder %s30, 0
      %p105 = por %p103, %p104
      %p106 = scmp.ne.s32.totalorder %s94, %s95
      %p107 = scmp.eq.s32.totalorder %s31, 3
      %p108 = por %p106, %p107
      %p110 = scmp.ne.s32.totalorder %s95, %s109
      %p111 = scmp.eq.s32.totalorder %s31, 0
      %p112 = por %p110, %p111
      %s113 = ssub.s32 %s33, %s40
      %p114 = scmp.eq.s32.totalorder %s113, 0
      %s116 = sadd.s32 %s115, 1
      %s117 = scalar_select %p114, %s115, %s116
      %p120 = pneg %p114
      %p121 = scmp.eq.s32.totalorder %s25, 3
      %p122 = por %p120, %p121
      %p123 = scmp.ne.s32.totalorder %s115, %s118
      %p124 = scmp.eq.s32.totalorder %s25, 0
      %p125 = por %p123, %p124
      %p126 = scmp.ne.s32.totalorder %s115, %s118
      %p127 = scmp.eq.s32.totalorder %s30, 3
      %p128 = por %p126, %p127
      %p129 = scmp.ne.s32.totalorder %s118, %s119
      %p130 = scmp.eq.s32.totalorder %s30, 0
      %p131 = por %p129, %p130
      %p132 = scmp.ne.s32.totalorder %s118, %s119
      %p133 = scmp.eq.s32.totalorder %s31, 3
      %p134 = por %p132, %p133
      %p136 = scmp.ne.s32.totalorder %s119, %s135
      %p137 = scmp.eq.s32.totalorder %s31, 0
      %p138 = por %p136, %p137
      %s139 = ssub.s32 %s33, %s40
      %p140 = scmp.eq.s32.totalorder %s139, 0
      %s142 = sadd.s32 %s141, 1
      %s143 = scalar_select %p140, %s141, %s142
      %p146 = pneg %p140
      %p147 = scmp.eq.s32.totalorder %s25, 3
      %p148 = por %p146, %p147
      %p149 = scmp.ne.s32.totalorder %s141, %s144
      %p150 = scmp.eq.s32.totalorder %s25, 0
      %p151 = por %p149, %p150
      %p152 = scmp.ne.s32.totalorder %s141, %s144
      %p153 = scmp.eq.s32.totalorder %s30, 3
      %p154 = por %p152, %p153
      %p155 = scmp.ne.s32.totalorder %s144, %s145
      %p156 = scmp.eq.s32.totalorder %s30, 0
      %p157 = por %p155, %p156
      %p158 = scmp.ne.s32.totalorder %s144, %s145
      %p159 = scmp.eq.s32.totalorder %s31, 3
      %p160 = por %p158, %p159
      %p162 = scmp.ne.s32.totalorder %s145, %s161
      %p163 = scmp.eq.s32.totalorder %s31, 0
      %p164 = por %p162, %p163
      %s166 = sadd.s32 %s165, 1
      %p169 = scmp.eq.s32.totalorder %s25, 3
      %p170 = scmp.ne.s32.totalorder %s165, %s167
      %p171 = scmp.eq.s32.totalorder %s25, 0
      %p172 = por %p170, %p171
      %p173 = scmp.ne.s32.totalorder %s165, %s167
      %p174 = scmp.eq.s32.totalorder %s30, 3
      %p175 = por %p173, %p174
      %p176 = scmp.ne.s32.totalorder %s167, %s168
      %p177 = scmp.eq.s32.totalorder %s30, 0
      %p178 = por %p176, %p177
      %p179 = scmp.ne.s32.totalorder %s167, %s168
      %p180 = scmp.eq.s32.totalorder %s31, 3
      %p181 = por %p179, %p180
      %p183 = scmp.ne.s32.totalorder %s168, %s182
      %p184 = scmp.eq.s32.totalorder %s31, 0
      %p185 = por %p183, %p184
      %s187 = sadd.s32 %s186, 1
      %p190 = scmp.eq.s32.totalorder %s25, 3
      %p191 = scmp.ne.s32.totalorder %s186, %s188
      %p192 = scmp.eq.s32.totalorder %s25, 0
      %p193 = por %p191, %p192
      %p194 = scmp.ne.s32.totalorder %s186, %s188
      %p195 = scmp.eq.s32.totalorder %s30, 3
      %p196 = por %p194, %p195
      %p197 = scmp.ne.s32.totalorder %s188, %s189
      %p198 = scmp.eq.s32.totalorder %s30, 0
      %p199 = por %p197, %p198
      %p200 = scmp.ne.s32.totalorder %s188, %s189
      %p201 = scmp.eq.s32.totalorder %s31, 3
      %p202 = por %p200, %p201
      %p204 = scmp.ne.s32.totalorder %s189, %s203
      %p205 = scmp.eq.s32.totalorder %s31, 0
      %p206 = por %p204, %p205
      %s208 = sadd.s32 %s207, 1
      %p211 = scmp.eq.s32.totalorder %s25, 3
      %p212 = scmp.ne.s32.totalorder %s207, %s209
      %p213 = scmp.eq.s32.totalorder %s25, 0
      %p214 = por %p212, %p213
      %p215 = scmp.ne.s32.totalorder %s207, %s209
      %p216 = scmp.eq.s32.totalorder %s30, 3
      %p217 = por %p215, %p216
      %p218 = scmp.ne.s32.totalorder %s209, %s210
      %p219 = scmp.eq.s32.totalorder %s30, 0
      %p220 = por %p218, %p219
      %p221 = scmp.ne.s32.totalorder %s209, %s210
      %p222 = scmp.eq.s32.totalorder %s31, 3
      %p223 = por %p221, %p222
      %p225 = scmp.ne.s32.totalorder %s210, %s224
      %p226 = scmp.eq.s32.totalorder %s31, 0
      %p227 = por %p225, %p226
      %s229 = sadd.s32 %s228, 1
      %p232 = scmp.eq.s32.totalorder %s25, 3
      %p233 = scmp.ne.s32.totalorder %s228, %s230
      %p234 = scmp.eq.s32.totalorder %s25, 0
      %p235 = por %p233, %p234
      %p236 = scmp.ne.s32.totalorder %s228, %s230
      %p237 = scmp.eq.s32.totalorder %s30, 3
      %p238 = por %p236, %p237
      %p239 = scmp.ne.s32.totalorder %s230, %s231
      %p240 = scmp.eq.s32.totalorder %s30, 0
      %p241 = por %p239, %p240
      %p242 = scmp.ne.s32.totalorder %s230, %s231
      %p243 = scmp.eq.s32.totalorder %s31, 3
      %p244 = por %p242, %p243
      %p246 = scmp.ne.s32.totalorder %s231, %s245
      %p247 = scmp.eq.s32.totalorder %s31, 0
      %p248 = por %p246, %p247
      %s249 = ssub.s32 %s32, %s44
      %p250 = scmp.eq.s32.totalorder %s249, 0
      %s252 = sadd.s32 %s251, 1
      %s253 = scalar_select %p250, %s251, %s252
      %p256 = pneg %p250
      %p257 = scmp.eq.s32.totalorder %s25, 3
      %p258 = por %p256, %p257
      %p259 = scmp.ne.s32.totalorder %s251, %s254
      %p260 = scmp.eq.s32.totalorder %s25, 0
      %p261 = por %p259, %p260
      %p262 = scmp.ne.s32.totalorder %s251, %s254
      %p263 = scmp.eq.s32.totalorder %s30, 3
      %p264 = por %p262, %p263
      %p265 = scmp.ne.s32.totalorder %s254, %s255
      %p266 = scmp.eq.s32.totalorder %s30, 0
      %p267 = por %p265, %p266
      %p268 = scmp.ne.s32.totalorder %s254, %s255
      %p269 = scmp.eq.s32.totalorder %s31, 3
      %p270 = por %p268, %p269
      %p272 = scmp.ne.s32.totalorder %s255, %s271
      %p273 = scmp.eq.s32.totalorder %s31, 0
      %p274 = por %p272, %p273
      %p275 = scmp.le.s32.totalorder 1, %s25
      %p276 = scmp.lt.s32.totalorder %s25, 5
      %p277 = pnand %p275, %p276
      %p278 = pneg %p277
      // Predicated region
      $region9: #{tpu_custom_call.1} parent=5 // pred_check
        _
      $region10: #{tpu_custom_call.1} parent=5 // pred_check_branch
        %280 = sbr.rel (%p277) target = $region12
      $region11: #{tpu_custom_call.1} parent=5 // pred_region
        %s281 = ssub.s32 %s25, 1
        // Predicated region
        $region13: #{tpu_custom_call.1} parent=11 // pred_check
          %p282 = pneg %p63
        $region14: #{tpu_custom_call.1} parent=11 // pred_check_branch
          %284 = sbr.rel (%p282) target = $region16
        $region15: #{tpu_custom_call.1} parent=11 // pred_region
          %286 = vsyncadd [#allocation5], 0
          %s287 = smul.addr %s34, 8
          %s288 = scalar_lea.hbm %s0, %s287
          %s290 = sshll.u32 %s288, 4
          %s291 = int_to_ptr.hbm [resolvable:$true] %s290
          %s292 = sshll.u32 [#allocation4], 4
          %s293 = int_to_ptr.vmem [resolvable:$true] %s292
          %295 = dma.hbm_to_vmem [thread:$0]  %s291, 128, %s293, [#allocation5]
        $region16: #{tpu_custom_call.1} parent=11 // pred_fallthru
          _
        // Predicated region
        $region17: #{tpu_custom_call.1} parent=11 // pred_check
          %p296 = pneg %p84
        $region18: #{tpu_custom_call.1} parent=11 // pred_check_branch
          %298 = sbr.rel (%p296) target = $region20
        $region19: #{tpu_custom_call.1} parent=11 // pred_region
          %300 = vsyncadd [#allocation8], 0
          %s301 = sshll.u32 %s1, 4
          %s302 = int_to_ptr.hbm [resolvable:$true] %s301
          %s303 = sshll.u32 [#allocation7], 4
          %s304 = int_to_ptr.vmem [resolvable:$true] %s303
          %309 = dma.hbm_to_vmem [thread:$0]  %s302, 1024, %s304, [#allocation8], 512, 512, 32
        $region20: #{tpu_custom_call.1} parent=11 // pred_fallthru
          _
        // Predicated region
        $region21: #{tpu_custom_call.1} parent=11 // pred_check
          %p310 = pneg %p105
        $region22: #{tpu_custom_call.1} parent=11 // pred_check_branch
          %312 = sbr.rel (%p310) target = $region24
        $region23: #{tpu_custom_call.1} parent=11 // pred_region
          %314 = vsyncadd [#allocation8], 0
          %s316 = sshll.u32 %s2, 4
          %s317 = int_to_ptr.hbm [resolvable:$true] %s316
          %s318 = sshll.u32 [#allocation9], 4
          %s319 = int_to_ptr.vmem [resolvable:$true] %s318
          %321 = dma.hbm_to_vmem [thread:$0]  %s317, 64, %s319, [#allocation8]
        $region24: #{tpu_custom_call.1} parent=11 // pred_fallthru
          _
        // Predicated region
        $region25: #{tpu_custom_call.1} parent=11 // pred_check
          %p322 = pneg %p178
        $region26: #{tpu_custom_call.1} parent=11 // pred_check_branch
          %324 = sbr.rel (%p322) target = $region28
        $region27: #{tpu_custom_call.1} parent=11 // pred_region
          %326 = vsyncadd [#allocation14], 0
          %s327 = sshll.u32 %s5, 4
          %s328 = int_to_ptr.hbm [resolvable:$true] %s327
          %s329 = sshll.u32 [#allocation13], 4
          %s330 = int_to_ptr.vmem [resolvable:$true] %s329
          %335 = dma.hbm_to_vmem [thread:$0]  %s328, 512, %s330, [#allocation14], 128, 128, 8
        $region28: #{tpu_custom_call.1} parent=11 // pred_fallthru
          _
        // Predicated region
        $region29: #{tpu_custom_call.1} parent=11 // pred_check
          %p336 = pneg %p199
        $region30: #{tpu_custom_call.1} parent=11 // pred_check_branch
          %338 = sbr.rel (%p336) target = $region32
        $region31: #{tpu_custom_call.1} parent=11 // pred_region
          %340 = vsyncadd [#allocation14], 0
          %s342 = sshll.u32 %s6, 4
          %s343 = int_to_ptr.hbm [resolvable:$true] %s342
          %s344 = sshll.u32 [#allocation15], 4
          %s345 = int_to_ptr.vmem [resolvable:$true] %s344
          %347 = dma.hbm_to_vmem [thread:$0]  %s343, 16, %s345, [#allocation14]
        $region32: #{tpu_custom_call.1} parent=11 // pred_fallthru
          _
        // Predicated region
        $region33: #{tpu_custom_call.1} parent=11 // pred_check
          %p348 = pneg %p220
        $region34: #{tpu_custom_call.1} parent=11 // pred_check_branch
          %350 = sbr.rel (%p348) target = $region36
        $region35: #{tpu_custom_call.1} parent=11 // pred_region
          %352 = vsyncadd [#allocation17], 0
          %s354 = sshll.u32 %s7, 4
          %s355 = int_to_ptr.hbm [resolvable:$true] %s354
          %s356 = sshll.u32 [#allocation16], 4
          %s357 = int_to_ptr.vmem [resolvable:$true] %s356
          %359 = dma.hbm_to_vmem [thread:$0]  %s355, 16, %s357, [#allocation17]
        $region36: #{tpu_custom_call.1} parent=11 // pred_fallthru
          _
        // Predicated region
        $region37: #{tpu_custom_call.1} parent=11 // pred_check
          %p360 = pneg %p241
        $region38: #{tpu_custom_call.1} parent=11 // pred_check_branch
          %362 = sbr.rel (%p360) target = $region40
        $region39: #{tpu_custom_call.1} parent=11 // pred_region
          _
        $region40: #{tpu_custom_call.1} parent=11 // pred_fallthru
          _
      $region12: #{tpu_custom_call.1} parent=5 // pred_fallthru
        _
      %p363 = scmp.lt.s32.totalorder %s25, 4
      // Predicated region
      $region41: #{tpu_custom_call.1} parent=5 // pred_check
        %p364 = pneg %p363
      $region42: #{tpu_custom_call.1} parent=5 // pred_check_branch
        %366 = sbr.rel (%p364) target = $region44
      $region43: #{tpu_custom_call.1} parent=5 // pred_region
        // Predicated region
        $region45: #{tpu_custom_call.1} parent=43 // pred_check
          %p367 = pneg %p125
        $region46: #{tpu_custom_call.1} parent=43 // pred_check_branch
          %369 = sbr.rel (%p367) target = $region48
        $region47: #{tpu_custom_call.1} parent=43 // pred_region
          %s370 = sand.u32 %s25, 1
          %s371 = scalar_lea.sflag [#allocation11], %s370
          %s372 = sand.u32 %s115, 1
          %s373 = smul.addr %s372, 2048
          %s374 = scalar_lea.vmem [#allocation10], %s373
          %376 = vsyncadd %s371, 0
          %s377 = smul.addr %s33, 256
          %s378 = smul.addr %s377, 8
          %s379 = scalar_lea.hbm %s3, %s378
          %s380 = sshll.u32 %s379, 4
          %s381 = int_to_ptr.hbm [resolvable:$true] %s380
          %s382 = sshll.u32 %s374, 4
          %s383 = int_to_ptr.vmem [resolvable:$true] %s382
          %388 = dma.hbm_to_vmem [thread:$0]  %s381, 32768, %s383, %s371, 512, 512, 32
        $region48: #{tpu_custom_call.1} parent=43 // pred_fallthru
          _
        // Predicated region
        $region49: #{tpu_custom_call.1} parent=43 // pred_check
          %p389 = pneg %p151
        $region50: #{tpu_custom_call.1} parent=43 // pred_check_branch
          %391 = sbr.rel (%p389) target = $region52
        $region51: #{tpu_custom_call.1} parent=43 // pred_region
          %s392 = sand.u32 %s25, 1
          %s393 = scalar_lea.sflag [#allocation11], %s392
          %s394 = sand.u32 %s141, 1
          %s395 = smul.addr %s394, 4
          %s396 = scalar_lea.vmem [#allocation12], %s395
          %398 = vsyncadd %s393, 0
          %s399 = smul.addr %s33, 4
          %s400 = scalar_lea.hbm %s4, %s399
          %s402 = sshll.u32 %s400, 4
          %s403 = int_to_ptr.hbm [resolvable:$true] %s402
          %s404 = sshll.u32 %s396, 4
          %s405 = int_to_ptr.vmem [resolvable:$true] %s404
          %407 = dma.hbm_to_vmem [thread:$0]  %s403, 64, %s405, %s393
        $region52: #{tpu_custom_call.1} parent=43 // pred_fallthru
          _
      $region44: #{tpu_custom_call.1} parent=5 // pred_fallthru
        _
      %p408 = scmp.le.s32.totalorder 1, %s25
      %p409 = scmp.lt.s32.totalorder %s25, 5
      %p410 = pnand %p408, %p409
      %p411 = pneg %p410
      // Predicated region
      $region53: #{tpu_custom_call.1} parent=5 // pred_check
        _
      $region54: #{tpu_custom_call.1} parent=5 // pred_check_branch
        %413 = sbr.rel (%p410) target = $region56
      $region55: #{tpu_custom_call.1} parent=5 // pred_region
        %s414 = ssub.s32 %s25, 1
        // Predicated region
        $region57: #{tpu_custom_call.1} parent=55 // pred_check
          %p415 = pneg %p63
        $region58: #{tpu_custom_call.1} parent=55 // pred_check_branch
          %417 = sbr.rel (%p415) target = $region60
        $region59: #{tpu_custom_call.1} parent=55 // pred_region
          %419 = dma.done [#allocation5], 128
        $region60: #{tpu_custom_call.1} parent=55 // pred_fallthru
          _
        // Predicated region
        $region61: #{tpu_custom_call.1} parent=55 // pred_check
          %p420 = pneg %p84
        $region62: #{tpu_custom_call.1} parent=55 // pred_check_branch
          %422 = sbr.rel (%p420) target = $region64
        $region63: #{tpu_custom_call.1} parent=55 // pred_region
          %424 = dma.done [#allocation8], 1024
        $region64: #{tpu_custom_call.1} parent=55 // pred_fallthru
          _
        // Predicated region
        $region65: #{tpu_custom_call.1} parent=55 // pred_check
          %p425 = pneg %p105
        $region66: #{tpu_custom_call.1} parent=55 // pred_check_branch
          %427 = sbr.rel (%p425) target = $region68
        $region67: #{tpu_custom_call.1} parent=55 // pred_region
          %429 = dma.done [#allocation8], 64
        $region68: #{tpu_custom_call.1} parent=55 // pred_fallthru
          _
        %s430 = sand.u32 %s30, 1
        %s431 = scalar_lea.sflag [#allocation11], %s430
        %s432 = sand.u32 %s118, 1
        %s433 = smul.addr %s432, 2048
        %s434 = scalar_lea.vmem [#allocation10], %s433
        // Predicated region
        $region69: #{tpu_custom_call.1} parent=55 // pred_check
          %p435 = pneg %p131
        $region70: #{tpu_custom_call.1} parent=55 // pred_check_branch
          %437 = sbr.rel (%p435) target = $region72
        $region71: #{tpu_custom_call.1} parent=55 // pred_region
          %439 = dma.done %s431, 32768
        $region72: #{tpu_custom_call.1} parent=55 // pred_fallthru
          _
        %s440 = sand.u32 %s30, 1
        %s441 = scalar_lea.sflag [#allocation11], %s440
        %s442 = sand.u32 %s144, 1
        %s443 = smul.addr %s442, 4
        %s444 = scalar_lea.vmem [#allocation12], %s443
        // Predicated region
        $region73: #{tpu_custom_call.1} parent=55 // pred_check
          %p445 = pneg %p157
        $region74: #{tpu_custom_call.1} parent=55 // pred_check_branch
          %447 = sbr.rel (%p445) target = $region76
        $region75: #{tpu_custom_call.1} parent=55 // pred_region
          %449 = dma.done %s441, 64
        $region76: #{tpu_custom_call.1} parent=55 // pred_fallthru
          _
        // Predicated region
        $region77: #{tpu_custom_call.1} parent=55 // pred_check
          %p450 = pneg %p178
        $region78: #{tpu_custom_call.1} parent=55 // pred_check_branch
          %452 = sbr.rel (%p450) target = $region80
        $region79: #{tpu_custom_call.1} parent=55 // pred_region
          %454 = dma.done [#allocation14], 512
        $region80: #{tpu_custom_call.1} parent=55 // pred_fallthru
          _
        // Predicated region
        $region81: #{tpu_custom_call.1} parent=55 // pred_check
          %p455 = pneg %p199
        $region82: #{tpu_custom_call.1} parent=55 // pred_check_branch
          %457 = sbr.rel (%p455) target = $region84
        $region83: #{tpu_custom_call.1} parent=55 // pred_region
          %459 = dma.done [#allocation14], 16
        $region84: #{tpu_custom_call.1} parent=55 // pred_fallthru
          _
        // Predicated region
        $region85: #{tpu_custom_call.1} parent=55 // pred_check
          %p460 = pneg %p220
        $region86: #{tpu_custom_call.1} parent=55 // pred_check_branch
          %462 = sbr.rel (%p460) target = $region88
        $region87: #{tpu_custom_call.1} parent=55 // pred_region
          %464 = dma.done [#allocation17], 16
        $region88: #{tpu_custom_call.1} parent=55 // pred_fallthru
          _
        %p465 = pneg %p63
        %p466 = pneg %p60
        %p467 = pneg %p84
        %p468 = pneg %p81
        %p469 = pneg %p105
        %p470 = pneg %p102
        %s471 = sand.u32 %s30, 1
        %s472 = scalar_lea.sflag [#allocation11], %s471
        %s473 = sand.u32 %s118, 1
        %s474 = smul.addr %s473, 2048
        %s475 = scalar_lea.vmem [#allocation10], %s474
        %p476 = pneg %p131
        %p477 = pneg %p128
        %s478 = sand.u32 %s30, 1
        %s479 = scalar_lea.sflag [#allocation11], %s478
        %s480 = sand.u32 %s144, 1
        %s481 = smul.addr %s480, 4
        %s482 = scalar_lea.vmem [#allocation12], %s481
        %p483 = pneg %p157
        %p484 = pneg %p154
        %p485 = pneg %p178
        %p486 = pneg %p175
        %p487 = pneg %p199
        %p488 = pneg %p196
        %p489 = pneg %p220
        %p490 = pneg %p217
        %p491 = pneg %p241
        %p492 = pneg %p238
        %p493 = pneg %p267
        %p494 = pneg %p264
        %p495 = scmp.eq.s32.totalorder %s35, 0
        // Predicated region
        $region89: #{tpu_custom_call.1} parent=55 // pred_check
          %p496 = pneg %p495
        $region90: #{tpu_custom_call.1} parent=55 // pred_check_branch
          %498 = sbr.rel (%p496) target = $region92
        $region91: #{tpu_custom_call.1} parent=55 // pred_region
          %v499 = vld [vmem:[#allocation4] sm:$0xff]
          %v500 = vld [vmem:[#allocation7] sm:$0xff]
          %v501 = vld [vmem:[#allocation7 + $0x8] sm:$0xff]
          %v502 = vld [vmem:[#allocation7 + $0x10] sm:$0xff]
          %v503 = vld [vmem:[#allocation7 + $0x18] sm:$0xff]
          %v504 = vld [vmem:[#allocation7 + $0x20] sm:$0xff]
          %v505 = vld [vmem:[#allocation7 + $0x28] sm:$0xff]
          %v506 = vld [vmem:[#allocation7 + $0x30] sm:$0xff]
          %v507 = vld [vmem:[#allocation7 + $0x38] sm:$0xff]
          %v508 = vld [vmem:[#allocation9] sm:$0xf]
          %v510 = vperm.slane %v508, 0
          %v511 = vperm.slane %v508, 1
          %v512 = vperm.slane %v508, 2
          %v513 = vperm.slane %v508, 3
          %vm518 = vcmask 130048
          %v520 = vsel %vm518, %v499, 0
          %522 = vmatpush.msra.mxu0 0.0
          %523 = vmatpush.msra.mxu0 0.0
          %524 = vmatpush.msra.mxu0 0.0
          %525 = vmatpush.msra.mxu0 0.0
          %526 = vmatpush.msra.mxu0 0.0
          %527 = vmatpush.msra.mxu0 0.0
          %528 = vmatpush.msra.mxu0 0.0
          %529 = vmatpush.msra.mxu0 0.0
          %530 = vmatpush.msra.mxu0 0.0
          %531 = vmatpush.msra.mxu0 0.0
          %532 = vmatpush.msra.mxu0 0.0
          %533 = vmatpush.msra.mxu0 0.0
          %534 = vmatpush.msra.mxu0 0.0
          %535 = vmatpush.msra.mxu0 0.0
          %536 = vmatpush.msra.mxu0 %v504
          %537 = vmatpush.msra.mxu0 %v500
          %538 = vmatmul.f32.gmra.mxu0 %v520
          %v539 = vpop.f32.mrf.mxu0
          %v540 = vadd.f32 %v510, %v539
          %541 = vdwg.mxu0
          %542 = vmatpush.msra.mxu0 0.0
          %543 = vmatpush.msra.mxu0 0.0
          %544 = vmatpush.msra.mxu0 0.0
          %545 = vmatpush.msra.mxu0 0.0
          %546 = vmatpush.msra.mxu0 0.0
          %547 = vmatpush.msra.mxu0 0.0
          %548 = vmatpush.msra.mxu0 0.0
          %549 = vmatpush.msra.mxu0 0.0
          %550 = vmatpush.msra.mxu0 0.0
          %551 = vmatpush.msra.mxu0 0.0
          %552 = vmatpush.msra.mxu0 0.0
          %553 = vmatpush.msra.mxu0 0.0
          %554 = vmatpush.msra.mxu0 0.0
          %555 = vmatpush.msra.mxu0 0.0
          %556 = vmatpush.msra.mxu0 %v505
          %557 = vmatpush.msra.mxu0 %v501
          %558 = vmatmul.f32.gmra.mxu0 %v520
          %v559 = vpop.f32.mrf.mxu0
          %v560 = vadd.f32 %v511, %v559
          %561 = vdwg.mxu0
          %562 = vmatpush.msra.mxu0 0.0
          %563 = vmatpush.msra.mxu0 0.0
          %564 = vmatpush.msra.mxu0 0.0
          %565 = vmatpush.msra.mxu0 0.0
          %566 = vmatpush.msra.mxu0 0.0
          %567 = vmatpush.msra.mxu0 0.0
          %568 = vmatpush.msra.mxu0 0.0
          %569 = vmatpush.msra.mxu0 0.0
          %570 = vmatpush.msra.mxu0 0.0
          %571 = vmatpush.msra.mxu0 0.0
          %572 = vmatpush.msra.mxu0 0.0
          %573 = vmatpush.msra.mxu0 0.0
          %574 = vmatpush.msra.mxu0 0.0
          %575 = vmatpush.msra.mxu0 0.0
          %576 = vmatpush.msra.mxu0 %v506
          %577 = vmatpush.msra.mxu0 %v502
          %578 = vmatmul.f32.gmra.mxu0 %v520
          %v579 = vpop.f32.mrf.mxu0
          %v580 = vadd.f32 %v512, %v579
          %581 = vdwg.mxu0
          %582 = vmatpush.msra.mxu0 0.0
          %583 = vmatpush.msra.mxu0 0.0
          %584 = vmatpush.msra.mxu0 0.0
          %585 = vmatpush.msra.mxu0 0.0
          %586 = vmatpush.msra.mxu0 0.0
          %587 = vmatpush.msra.mxu0 0.0
          %588 = vmatpush.msra.mxu0 0.0
          %589 = vmatpush.msra.mxu0 0.0
          %590 = vmatpush.msra.mxu0 0.0
          %591 = vmatpush.msra.mxu0 0.0
          %592 = vmatpush.msra.mxu0 0.0
          %593 = vmatpush.msra.mxu0 0.0
          %594 = vmatpush.msra.mxu0 0.0
          %595 = vmatpush.msra.mxu0 0.0
          %596 = vmatpush.msra.mxu0 %v507
          %597 = vmatpush.msra.mxu0 %v503
          %598 = vmatmul.f32.gmra.mxu0 %v520
          %v599 = vpop.f32.mrf.mxu0
          %v600 = vadd.f32 %v513, %v599
          %601 = vdwg.mxu0
          %602 = vst [vmem:[#allocation2] sm:$0xff] %v540
          %603 = vst [vmem:[#allocation2 + $0x8] sm:$0xff] %v560
          %604 = vst [vmem:[#allocation2 + $0x10] sm:$0xff] %v580
          %605 = vst [vmem:[#allocation2 + $0x18] sm:$0xff] %v600
        $region92: #{tpu_custom_call.1} parent=55 // pred_fallthru
          _
        %v606 = vld [vmem:[#allocation2] sm:$0xff]
        %v607 = vld [vmem:[#allocation2 + $0x8] sm:$0xff]
        %v608 = vld [vmem:[#allocation2 + $0x10] sm:$0xff]
        %v609 = vld [vmem:[#allocation2 + $0x18] sm:$0xff]
        %v610 = vld [vmem:[%s434] sm:$0xff]
        %v611 = vld [vmem:[%s434 + $0x8] sm:$0xff]
        %v612 = vld [vmem:[%s434 + $0x10] sm:$0xff]
        %v613 = vld [vmem:[%s434 + $0x18] sm:$0xff]
        %v614 = vld [vmem:[%s434 + $0x20] sm:$0xff]
        %v615 = vld [vmem:[%s434 + $0x28] sm:$0xff]
        %v616 = vld [vmem:[%s434 + $0x30] sm:$0xff]
        %v617 = vld [vmem:[%s434 + $0x38] sm:$0xff]
        %v618 = vld [vmem:[%s434 + $0x40] sm:$0xff]
        %v619 = vld [vmem:[%s434 + $0x48] sm:$0xff]
        %v620 = vld [vmem:[%s434 + $0x50] sm:$0xff]
        %v621 = vld [vmem:[%s434 + $0x58] sm:$0xff]
        %v622 = vld [vmem:[%s434 + $0x60] sm:$0xff]
        %v623 = vld [vmem:[%s434 + $0x68] sm:$0xff]
        %v624 = vld [vmem:[%s434 + $0x70] sm:$0xff]
        %v625 = vld [vmem:[%s434 + $0x78] sm:$0xff]
        %v626 = vld [vmem:[%s434 + $0x80] sm:$0xff]
        %v627 = vld [vmem:[%s434 + $0x88] sm:$0xff]
        %v628 = vld [vmem:[%s434 + $0x90] sm:$0xff]
        %v629 = vld [vmem:[%s434 + $0x98] sm:$0xff]
        %v630 = vld [vmem:[%s434 + $0xa0] sm:$0xff]
        %v631 = vld [vmem:[%s434 + $0xa8] sm:$0xff]
        %v632 = vld [vmem:[%s434 + $0xb0] sm:$0xff]
        %v633 = vld [vmem:[%s434 + $0xb8] sm:$0xff]
        %v634 = vld [vmem:[%s434 + $0xc0] sm:$0xff]
        %v635 = vld [vmem:[%s434 + $0xc8] sm:$0xff]
        %v636 = vld [vmem:[%s434 + $0xd0] sm:$0xff]
        %v637 = vld [vmem:[%s434 + $0xd8] sm:$0xff]
        %v638 = vld [vmem:[%s434 + $0xe0] sm:$0xff]
        %v639 = vld [vmem:[%s434 + $0xe8] sm:$0xff]
        %v640 = vld [vmem:[%s434 + $0xf0] sm:$0xff]
        %v641 = vld [vmem:[%s434 + $0xf8] sm:$0xff]
        %v642 = vld [vmem:[%s434 + $0x100] sm:$0xff]
        %v643 = vld [vmem:[%s434 + $0x108] sm:$0xff]
        %v644 = vld [vmem:[%s434 + $0x110] sm:$0xff]
        %v645 = vld [vmem:[%s434 + $0x118] sm:$0xff]
        %v646 = vld [vmem:[%s434 + $0x120] sm:$0xff]
        %v647 = vld [vmem:[%s434 + $0x128] sm:$0xff]
        %v648 = vld [vmem:[%s434 + $0x130] sm:$0xff]
        %v649 = vld [vmem:[%s434 + $0x138] sm:$0xff]
        %v650 = vld [vmem:[%s434 + $0x140] sm:$0xff]
        %v651 = vld [vmem:[%s434 + $0x148] sm:$0xff]
        %v652 = vld [vmem:[%s434 + $0x150] sm:$0xff]
        %v653 = vld [vmem:[%s434 + $0x158] sm:$0xff]
        %v654 = vld [vmem:[%s434 + $0x160] sm:$0xff]
        %v655 = vld [vmem:[%s434 + $0x168] sm:$0xff]
        %v656 = vld [vmem:[%s434 + $0x170] sm:$0xff]
        %v657 = vld [vmem:[%s434 + $0x178] sm:$0xff]
        %v658 = vld [vmem:[%s434 + $0x180] sm:$0xff]
        %v659 = vld [vmem:[%s434 + $0x188] sm:$0xff]
        %v660 = vld [vmem:[%s434 + $0x190] sm:$0xff]
        %v661 = vld [vmem:[%s434 + $0x198] sm:$0xff]
        %v662 = vld [vmem:[%s434 + $0x1a0] sm:$0xff]
        %v663 = vld [vmem:[%s434 + $0x1a8] sm:$0xff]
        %v664 = vld [vmem:[%s434 + $0x1b0] sm:$0xff]
        %v665 = vld [vmem:[%s434 + $0x1b8] sm:$0xff]
        %v666 = vld [vmem:[%s434 + $0x1c0] sm:$0xff]
        %v667 = vld [vmem:[%s434 + $0x1c8] sm:$0xff]
        %v668 = vld [vmem:[%s434 + $0x1d0] sm:$0xff]
        %v669 = vld [vmem:[%s434 + $0x1d8] sm:$0xff]
        %v670 = vld [vmem:[%s434 + $0x1e0] sm:$0xff]
        %v671 = vld [vmem:[%s434 + $0x1e8] sm:$0xff]
        %v672 = vld [vmem:[%s434 + $0x1f0] sm:$0xff]
        %v673 = vld [vmem:[%s434 + $0x1f8] sm:$0xff]
        %v674 = vld [vmem:[%s434 + $0x200] sm:$0xff]
        %v675 = vld [vmem:[%s434 + $0x208] sm:$0xff]
        %v676 = vld [vmem:[%s434 + $0x210] sm:$0xff]
        %v677 = vld [vmem:[%s434 + $0x218] sm:$0xff]
        %v678 = vld [vmem:[%s434 + $0x220] sm:$0xff]
        %v679 = vld [vmem:[%s434 + $0x228] sm:$0xff]
        %v680 = vld [vmem:[%s434 + $0x230] sm:$0xff]
        %v681 = vld [vmem:[%s434 + $0x238] sm:$0xff]
        %v682 = vld [vmem:[%s434 + $0x240] sm:$0xff]
        %v683 = vld [vmem:[%s434 + $0x248] sm:$0xff]
        %v684 = vld [vmem:[%s434 + $0x250] sm:$0xff]
        %v685 = vld [vmem:[%s434 + $0x258] sm:$0xff]
        %v686 = vld [vmem:[%s434 + $0x260] sm:$0xff]
        %v687 = vld [vmem:[%s434 + $0x268] sm:$0xff]
        %v688 = vld [vmem:[%s434 + $0x270] sm:$0xff]
        %v689 = vld [vmem:[%s434 + $0x278] sm:$0xff]
        %v690 = vld [vmem:[%s434 + $0x280] sm:$0xff]
        %v691 = vld [vmem:[%s434 + $0x288] sm:$0xff]
        %v692 = vld [vmem:[%s434 + $0x290] sm:$0xff]
        %v693 = vld [vmem:[%s434 + $0x298] sm:$0xff]
        %v694 = vld [vmem:[%s434 + $0x2a0] sm:$0xff]
        %v695 = vld [vmem:[%s434 + $0x2a8] sm:$0xff]
        %v696 = vld [vmem:[%s434 + $0x2b0] sm:$0xff]
        %v697 = vld [vmem:[%s434 + $0x2b8] sm:$0xff]
        %v698 = vld [vmem:[%s434 + $0x2c0] sm:$0xff]
        %v699 = vld [vmem:[%s434 + $0x2c8] sm:$0xff]
        %v700 = vld [vmem:[%s434 + $0x2d0] sm:$0xff]
        %v701 = vld [vmem:[%s434 + $0x2d8] sm:$0xff]
        %v702 = vld [vmem:[%s434 + $0x2e0] sm:$0xff]
        %v703 = vld [vmem:[%s434 + $0x2e8] sm:$0xff]
        %v704 = vld [vmem:[%s434 + $0x2f0] sm:$0xff]
        %v705 = vld [vmem:[%s434 + $0x2f8] sm:$0xff]
        %v706 = vld [vmem:[%s434 + $0x300] sm:$0xff]
        %v707 = vld [vmem:[%s434 + $0x308] sm:$0xff]
        %v708 = vld [vmem:[%s434 + $0x310] sm:$0xff]
        %v709 = vld [vmem:[%s434 + $0x318] sm:$0xff]
        %v710 = vld [vmem:[%s434 + $0x320] sm:$0xff]
        %v711 = vld [vmem:[%s434 + $0x328] sm:$0xff]
        %v712 = vld [vmem:[%s434 + $0x330] sm:$0xff]
        %v713 = vld [vmem:[%s434 + $0x338] sm:$0xff]
        %v714 = vld [vmem:[%s434 + $0x340] sm:$0xff]
        %v715 = vld [vmem:[%s434 + $0x348] sm:$0xff]
        %v716 = vld [vmem:[%s434 + $0x350] sm:$0xff]
        %v717 = vld [vmem:[%s434 + $0x358] sm:$0xff]
        %v718 = vld [vmem:[%s434 + $0x360] sm:$0xff]
        %v719 = vld [vmem:[%s434 + $0x368] sm:$0xff]
        %v720 = vld [vmem:[%s434 + $0x370] sm:$0xff]
        %v721 = vld [vmem:[%s434 + $0x378] sm:$0xff]
        %v722 = vld [vmem:[%s434 + $0x380] sm:$0xff]
        %v723 = vld [vmem:[%s434 + $0x388] sm:$0xff]
        %v724 = vld [vmem:[%s434 + $0x390] sm:$0xff]
        %v725 = vld [vmem:[%s434 + $0x398] sm:$0xff]
        %v726 = vld [vmem:[%s434 + $0x3a0] sm:$0xff]
        %v727 = vld [vmem:[%s434 + $0x3a8] sm:$0xff]
        %v728 = vld [vmem:[%s434 + $0x3b0] sm:$0xff]
        %v729 = vld [vmem:[%s434 + $0x3b8] sm:$0xff]
        %v730 = vld [vmem:[%s434 + $0x3c0] sm:$0xff]
        %v731 = vld [vmem:[%s434 + $0x3c8] sm:$0xff]
        %v732 = vld [vmem:[%s434 + $0x3d0] sm:$0xff]
        %v733 = vld [vmem:[%s434 + $0x3d8] sm:$0xff]
        %v734 = vld [vmem:[%s434 + $0x3e0] sm:$0xff]
        %v735 = vld [vmem:[%s434 + $0x3e8] sm:$0xff]
        %v736 = vld [vmem:[%s434 + $0x3f0] sm:$0xff]
        %v737 = vld [vmem:[%s434 + $0x3f8] sm:$0xff]
        %v738 = vld [vmem:[%s434 + $0x400] sm:$0xff]
        %v739 = vld [vmem:[%s434 + $0x408] sm:$0xff]
        %v740 = vld [vmem:[%s434 + $0x410] sm:$0xff]
        %v741 = vld [vmem:[%s434 + $0x418] sm:$0xff]
        %v742 = vld [vmem:[%s434 + $0x420] sm:$0xff]
        %v743 = vld [vmem:[%s434 + $0x428] sm:$0xff]
        %v744 = vld [vmem:[%s434 + $0x430] sm:$0xff]
        %v745 = vld [vmem:[%s434 + $0x438] sm:$0xff]
        %v746 = vld [vmem:[%s434 + $0x440] sm:$0xff]
        %v747 = vld [vmem:[%s434 + $0x448] sm:$0xff]
        %v748 = vld [vmem:[%s434 + $0x450] sm:$0xff]
        %v749 = vld [vmem:[%s434 + $0x458] sm:$0xff]
        %v750 = vld [vmem:[%s434 + $0x460] sm:$0xff]
        %v751 = vld [vmem:[%s434 + $0x468] sm:$0xff]
        %v752 = vld [vmem:[%s434 + $0x470] sm:$0xff]
        %v753 = vld [vmem:[%s434 + $0x478] sm:$0xff]
        %v754 = vld [vmem:[%s434 + $0x480] sm:$0xff]
        %v755 = vld [vmem:[%s434 + $0x488] sm:$0xff]
        %v756 = vld [vmem:[%s434 + $0x490] sm:$0xff]
        %v757 = vld [vmem:[%s434 + $0x498] sm:$0xff]
        %v758 = vld [vmem:[%s434 + $0x4a0] sm:$0xff]
        %v759 = vld [vmem:[%s434 + $0x4a8] sm:$0xff]
        %v760 = vld [vmem:[%s434 + $0x4b0] sm:$0xff]
        %v761 = vld [vmem:[%s434 + $0x4b8] sm:$0xff]
        %v762 = vld [vmem:[%s434 + $0x4c0] sm:$0xff]
        %v763 = vld [vmem:[%s434 + $0x4c8] sm:$0xff]
        %v764 = vld [vmem:[%s434 + $0x4d0] sm:$0xff]
        %v765 = vld [vmem:[%s434 + $0x4d8] sm:$0xff]
        %v766 = vld [vmem:[%s434 + $0x4e0] sm:$0xff]
        %v767 = vld [vmem:[%s434 + $0x4e8] sm:$0xff]
        %v768 = vld [vmem:[%s434 + $0x4f0] sm:$0xff]
        %v769 = vld [vmem:[%s434 + $0x4f8] sm:$0xff]
        %v770 = vld [vmem:[%s434 + $0x500] sm:$0xff]
        %v771 = vld [vmem:[%s434 + $0x508] sm:$0xff]
        %v772 = vld [vmem:[%s434 + $0x510] sm:$0xff]
        %v773 = vld [vmem:[%s434 + $0x518] sm:$0xff]
        %v774 = vld [vmem:[%s434 + $0x520] sm:$0xff]
        %v775 = vld [vmem:[%s434 + $0x528] sm:$0xff]
        %v776 = vld [vmem:[%s434 + $0x530] sm:$0xff]
        %v777 = vld [vmem:[%s434 + $0x538] sm:$0xff]
        %v778 = vld [vmem:[%s434 + $0x540] sm:$0xff]
        %v779 = vld [vmem:[%s434 + $0x548] sm:$0xff]
        %v780 = vld [vmem:[%s434 + $0x550] sm:$0xff]
        %v781 = vld [vmem:[%s434 + $0x558] sm:$0xff]
        %v782 = vld [vmem:[%s434 + $0x560] sm:$0xff]
        %v783 = vld [vmem:[%s434 + $0x568] sm:$0xff]
        %v784 = vld [vmem:[%s434 + $0x570] sm:$0xff]
        %v785 = vld [vmem:[%s434 + $0x578] sm:$0xff]
        %v786 = vld [vmem:[%s434 + $0x580] sm:$0xff]
        %v787 = vld [vmem:[%s434 + $0x588] sm:$0xff]
        %v788 = vld [vmem:[%s434 + $0x590] sm:$0xff]
        %v789 = vld [vmem:[%s434 + $0x598] sm:$0xff]
        %v790 = vld [vmem:[%s434 + $0x5a0] sm:$0xff]
        %v791 = vld [vmem:[%s434 + $0x5a8] sm:$0xff]
        %v792 = vld [vmem:[%s434 + $0x5b0] sm:$0xff]
        %v793 = vld [vmem:[%s434 + $0x5b8] sm:$0xff]
        %v794 = vld [vmem:[%s434 + $0x5c0] sm:$0xff]
        %v795 = vld [vmem:[%s434 + $0x5c8] sm:$0xff]
        %v796 = vld [vmem:[%s434 + $0x5d0] sm:$0xff]
        %v797 = vld [vmem:[%s434 + $0x5d8] sm:$0xff]
        %v798 = vld [vmem:[%s434 + $0x5e0] sm:$0xff]
        %v799 = vld [vmem:[%s434 + $0x5e8] sm:$0xff]
        %v800 = vld [vmem:[%s434 + $0x5f0] sm:$0xff]
        %v801 = vld [vmem:[%s434 + $0x5f8] sm:$0xff]
        %v802 = vld [vmem:[%s434 + $0x600] sm:$0xff]
        %v803 = vld [vmem:[%s434 + $0x608] sm:$0xff]
        %v804 = vld [vmem:[%s434 + $0x610] sm:$0xff]
        %v805 = vld [vmem:[%s434 + $0x618] sm:$0xff]
        %v806 = vld [vmem:[%s434 + $0x620] sm:$0xff]
        %v807 = vld [vmem:[%s434 + $0x628] sm:$0xff]
        %v808 = vld [vmem:[%s434 + $0x630] sm:$0xff]
        %v809 = vld [vmem:[%s434 + $0x638] sm:$0xff]
        %v810 = vld [vmem:[%s434 + $0x640] sm:$0xff]
        %v811 = vld [vmem:[%s434 + $0x648] sm:$0xff]
        %v812 = vld [vmem:[%s434 + $0x650] sm:$0xff]
        %v813 = vld [vmem:[%s434 + $0x658] sm:$0xff]
        %v814 = vld [vmem:[%s434 + $0x660] sm:$0xff]
        %v815 = vld [vmem:[%s434 + $0x668] sm:$0xff]
        %v816 = vld [vmem:[%s434 + $0x670] sm:$0xff]
        %v817 = vld [vmem:[%s434 + $0x678] sm:$0xff]
        %v818 = vld [vmem:[%s434 + $0x680] sm:$0xff]
        %v819 = vld [vmem:[%s434 + $0x688] sm:$0xff]
        %v820 = vld [vmem:[%s434 + $0x690] sm:$0xff]
        %v821 = vld [vmem:[%s434 + $0x698] sm:$0xff]
        %v822 = vld [vmem:[%s434 + $0x6a0] sm:$0xff]
        %v823 = vld [vmem:[%s434 + $0x6a8] sm:$0xff]
        %v824 = vld [vmem:[%s434 + $0x6b0] sm:$0xff]
        %v825 = vld [vmem:[%s434 + $0x6b8] sm:$0xff]
        %v826 = vld [vmem:[%s434 + $0x6c0] sm:$0xff]
        %v827 = vld [vmem:[%s434 + $0x6c8] sm:$0xff]
        %v828 = vld [vmem:[%s434 + $0x6d0] sm:$0xff]
        %v829 = vld [vmem:[%s434 + $0x6d8] sm:$0xff]
        %v830 = vld [vmem:[%s434 + $0x6e0] sm:$0xff]
        %v831 = vld [vmem:[%s434 + $0x6e8] sm:$0xff]
        %v832 = vld [vmem:[%s434 + $0x6f0] sm:$0xff]
        %v833 = vld [vmem:[%s434 + $0x6f8] sm:$0xff]
        %v834 = vld [vmem:[%s434 + $0x700] sm:$0xff]
        %v835 = vld [vmem:[%s434 + $0x708] sm:$0xff]
        %v836 = vld [vmem:[%s434 + $0x710] sm:$0xff]
        %v837 = vld [vmem:[%s434 + $0x718] sm:$0xff]
        %v838 = vld [vmem:[%s434 + $0x720] sm:$0xff]
        %v839 = vld [vmem:[%s434 + $0x728] sm:$0xff]
        %v840 = vld [vmem:[%s434 + $0x730] sm:$0xff]
        %v841 = vld [vmem:[%s434 + $0x738] sm:$0xff]
        %v842 = vld [vmem:[%s434 + $0x740] sm:$0xff]
        %v843 = vld [vmem:[%s434 + $0x748] sm:$0xff]
        %v844 = vld [vmem:[%s434 + $0x750] sm:$0xff]
        %v845 = vld [vmem:[%s434 + $0x758] sm:$0xff]
        %v846 = vld [vmem:[%s434 + $0x760] sm:$0xff]
        %v847 = vld [vmem:[%s434 + $0x768] sm:$0xff]
        %v848 = vld [vmem:[%s434 + $0x770] sm:$0xff]
        %v849 = vld [vmem:[%s434 + $0x778] sm:$0xff]
        %v850 = vld [vmem:[%s434 + $0x780] sm:$0xff]
        %v851 = vld [vmem:[%s434 + $0x788] sm:$0xff]
        %v852 = vld [vmem:[%s434 + $0x790] sm:$0xff]
        %v853 = vld [vmem:[%s434 + $0x798] sm:$0xff]
        %v854 = vld [vmem:[%s434 + $0x7a0] sm:$0xff]
        %v855 = vld [vmem:[%s434 + $0x7a8] sm:$0xff]
        %v856 = vld [vmem:[%s434 + $0x7b0] sm:$0xff]
        %v857 = vld [vmem:[%s434 + $0x7b8] sm:$0xff]
        %v858 = vld [vmem:[%s434 + $0x7c0] sm:$0xff]
        %v859 = vld [vmem:[%s434 + $0x7c8] sm:$0xff]
        %v860 = vld [vmem:[%s434 + $0x7d0] sm:$0xff]
        %v861 = vld [vmem:[%s434 + $0x7d8] sm:$0xff]
        %v862 = vld [vmem:[%s434 + $0x7e0] sm:$0xff]
        %v863 = vld [vmem:[%s434 + $0x7e8] sm:$0xff]
        %v864 = vld [vmem:[%s434 + $0x7f0] sm:$0xff]
        %v865 = vld [vmem:[%s434 + $0x7f8] sm:$0xff]
        %v866 = vld [vmem:[%s444] sm:$0xf]
        %v868 = vperm.slane %v866, 0
        %v869 = vperm.slane %v866, 1
        %v870 = vperm.slane %v866, 2
        %v871 = vperm.slane %v866, 3
        %876 = vmatpush.msra.mxu0 %v670
        %877 = vmatpush.msra.mxu0 %v666
        %878 = vmatpush.msra.mxu0 %v662
        %879 = vmatpush.msra.mxu0 %v658
        %880 = vmatpush.msra.mxu0 %v654
        %881 = vmatpush.msra.mxu0 %v650
        %882 = vmatpush.msra.mxu0 %v646
        %883 = vmatpush.msra.mxu0 %v642
        %884 = vmatpush.msra.mxu0 %v638
        %885 = vmatpush.msra.mxu0 %v634
        %886 = vmatpush.msra.mxu0 %v630
        %887 = vmatpush.msra.mxu0 %v626
        %888 = vmatpush.msra.mxu0 %v622
        %889 = vmatpush.msra.mxu0 %v618
        %890 = vmatpush.msra.mxu0 %v614
        %891 = vmatpush.msra.mxu0 %v610
        %892 = vmatmul.f32.gmra.mxu0 %v606
        %v893 = vpop.f32.mrf.mxu0
        %v894 = vadd.f32 %v868, %v893
        %895 = vdwg.mxu0
        %896 = vmatpush.msra.mxu0 %v734
        %897 = vmatpush.msra.mxu0 %v730
        %898 = vmatpush.msra.mxu0 %v726
        %899 = vmatpush.msra.mxu0 %v722
        %900 = vmatpush.msra.mxu0 %v718
        %901 = vmatpush.msra.mxu0 %v714
        %902 = vmatpush.msra.mxu0 %v710
        %903 = vmatpush.msra.mxu0 %v706
        %904 = vmatpush.msra.mxu0 %v702
        %905 = vmatpush.msra.mxu0 %v698
        %906 = vmatpush.msra.mxu0 %v694
        %907 = vmatpush.msra.mxu0 %v690
        %908 = vmatpush.msra.mxu0 %v686
        %909 = vmatpush.msra.mxu0 %v682
        %910 = vmatpush.msra.mxu0 %v678
        %911 = vmatpush.msra.mxu0 %v674
        %912 = vmatmul.f32.gmra.mxu0 %v607
        %v913 = vpop.f32.mrf.mxu0
        %v914 = vadd.f32 %v894, %v913
        %915 = vdwg.mxu0
        %916 = vmatpush.msra.mxu0 %v798
        %917 = vmatpush.msra.mxu0 %v794
        %918 = vmatpush.msra.mxu0 %v790
        %919 = vmatpush.msra.mxu0 %v786
        %920 = vmatpush.msra.mxu0 %v782
        %921 = vmatpush.msra.mxu0 %v778
        %922 = vmatpush.msra.mxu0 %v774
        %923 = vmatpush.msra.mxu0 %v770
        %924 = vmatpush.msra.mxu0 %v766
        %925 = vmatpush.msra.mxu0 %v762
        %926 = vmatpush.msra.mxu0 %v758
        %927 = vmatpush.msra.mxu0 %v754
        %928 = vmatpush.msra.mxu0 %v750
        %929 = vmatpush.msra.mxu0 %v746
        %930 = vmatpush.msra.mxu0 %v742
        %931 = vmatpush.msra.mxu0 %v738
        %932 = vmatmul.f32.gmra.mxu0 %v608
        %v933 = vpop.f32.mrf.mxu0
        %v934 = vadd.f32 %v914, %v933
        %935 = vdwg.mxu0
        %936 = vmatpush.msra.mxu0 %v862
        %937 = vmatpush.msra.mxu0 %v858
        %938 = vmatpush.msra.mxu0 %v854
        %939 = vmatpush.msra.mxu0 %v850
        %940 = vmatpush.msra.mxu0 %v846
        %941 = vmatpush.msra.mxu0 %v842
        %942 = vmatpush.msra.mxu0 %v838
        %943 = vmatpush.msra.mxu0 %v834
        %944 = vmatpush.msra.mxu0 %v830
        %945 = vmatpush.msra.mxu0 %v826
        %946 = vmatpush.msra.mxu0 %v822
        %947 = vmatpush.msra.mxu0 %v818
        %948 = vmatpush.msra.mxu0 %v814
        %949 = vmatpush.msra.mxu0 %v810
        %950 = vmatpush.msra.mxu0 %v806
        %951 = vmatpush.msra.mxu0 %v802
        %952 = vmatmul.f32.gmra.mxu0 %v609
        %v953 = vpop.f32.mrf.mxu0
        %v954 = vadd.f32 %v934, %v953
        %955 = vdwg.mxu0
        %956 = vmatpush.msra.mxu0 %v671
        %957 = vmatpush.msra.mxu0 %v667
        %958 = vmatpush.msra.mxu0 %v663
        %959 = vmatpush.msra.mxu0 %v659
        %960 = vmatpush.msra.mxu0 %v655
        %961 = vmatpush.msra.mxu0 %v651
        %962 = vmatpush.msra.mxu0 %v647
        %963 = vmatpush.msra.mxu0 %v643
        %964 = vmatpush.msra.mxu0 %v639
        %965 = vmatpush.msra.mxu0 %v635
        %966 = vmatpush.msra.mxu0 %v631
        %967 = vmatpush.msra.mxu0 %v627
        %968 = vmatpush.msra.mxu0 %v623
        %969 = vmatpush.msra.mxu0 %v619
        %970 = vmatpush.msra.mxu0 %v615
        %971 = vmatpush.msra.mxu0 %v611
        %972 = vmatmul.f32.gmra.mxu0 %v606
        %v973 = vpop.f32.mrf.mxu0
        %v974 = vadd.f32 %v869, %v973
        %975 = vdwg.mxu0
        %976 = vmatpush.msra.mxu0 %v735
        %977 = vmatpush.msra.mxu0 %v731
        %978 = vmatpush.msra.mxu0 %v727
        %979 = vmatpush.msra.mxu0 %v723
        %980 = vmatpush.msra.mxu0 %v719
        %981 = vmatpush.msra.mxu0 %v715
        %982 = vmatpush.msra.mxu0 %v711
        %983 = vmatpush.msra.mxu0 %v707
        %984 = vmatpush.msra.mxu0 %v703
        %985 = vmatpush.msra.mxu0 %v699
        %986 = vmatpush.msra.mxu0 %v695
        %987 = vmatpush.msra.mxu0 %v691
        %988 = vmatpush.msra.mxu0 %v687
        %989 = vmatpush.msra.mxu0 %v683
        %990 = vmatpush.msra.mxu0 %v679
        %991 = vmatpush.msra.mxu0 %v675
        %992 = vmatmul.f32.gmra.mxu0 %v607
        %v993 = vpop.f32.mrf.mxu0
        %v994 = vadd.f32 %v974, %v993
        %995 = vdwg.mxu0
        %996 = vmatpush.msra.mxu0 %v799
        %997 = vmatpush.msra.mxu0 %v795
        %998 = vmatpush.msra.mxu0 %v791
        %999 = vmatpush.msra.mxu0 %v787
        %1000 = vmatpush.msra.mxu0 %v783
        %1001 = vmatpush.msra.mxu0 %v779
        %1002 = vmatpush.msra.mxu0 %v775
        %1003 = vmatpush.msra.mxu0 %v771
        %1004 = vmatpush.msra.mxu0 %v767
        %1005 = vmatpush.msra.mxu0 %v763
        %1006 = vmatpush.msra.mxu0 %v759
        %1007 = vmatpush.msra.mxu0 %v755
        %1008 = vmatpush.msra.mxu0 %v751
        %1009 = vmatpush.msra.mxu0 %v747
        %1010 = vmatpush.msra.mxu0 %v743
        %1011 = vmatpush.msra.mxu0 %v739
        %1012 = vmatmul.f32.gmra.mxu0 %v608
        %v1013 = vpop.f32.mrf.mxu0
        %v1014 = vadd.f32 %v994, %v1013
        %1015 = vdwg.mxu0
        %1016 = vmatpush.msra.mxu0 %v863
        %1017 = vmatpush.msra.mxu0 %v859
        %1018 = vmatpush.msra.mxu0 %v855
        %1019 = vmatpush.msra.mxu0 %v851
        %1020 = vmatpush.msra.mxu0 %v847
        %1021 = vmatpush.msra.mxu0 %v843
        %1022 = vmatpush.msra.mxu0 %v839
        %1023 = vmatpush.msra.mxu0 %v835
        %1024 = vmatpush.msra.mxu0 %v831
        %1025 = vmatpush.msra.mxu0 %v827
        %1026 = vmatpush.msra.mxu0 %v823
        %1027 = vmatpush.msra.mxu0 %v819
        %1028 = vmatpush.msra.mxu0 %v815
        %1029 = vmatpush.msra.mxu0 %v811
        %1030 = vmatpush.msra.mxu0 %v807
        %1031 = vmatpush.msra.mxu0 %v803
        %1032 = vmatmul.f32.gmra.mxu0 %v609
        %v1033 = vpop.f32.mrf.mxu0
        %v1034 = vadd.f32 %v1014, %v1033
        %1035 = vdwg.mxu0
        %1036 = vmatpush.msra.mxu0 %v672
        %1037 = vmatpush.msra.mxu0 %v668
        %1038 = vmatpush.msra.mxu0 %v664
        %1039 = vmatpush.msra.mxu0 %v660
        %1040 = vmatpush.msra.mxu0 %v656
        %1041 = vmatpush.msra.mxu0 %v652
        %1042 = vmatpush.msra.mxu0 %v648
        %1043 = vmatpush.msra.mxu0 %v644
        %1044 = vmatpush.msra.mxu0 %v640
        %1045 = vmatpush.msra.mxu0 %v636
        %1046 = vmatpush.msra.mxu0 %v632
        %1047 = vmatpush.msra.mxu0 %v628
        %1048 = vmatpush.msra.mxu0 %v624
        %1049 = vmatpush.msra.mxu0 %v620
        %1050 = vmatpush.msra.mxu0 %v616
        %1051 = vmatpush.msra.mxu0 %v612
        %1052 = vmatmul.f32.gmra.mxu0 %v606
        %v1053 = vpop.f32.mrf.mxu0
        %v1054 = vadd.f32 %v870, %v1053
        %1055 = vdwg.mxu0
        %1056 = vmatpush.msra.mxu0 %v736
        %1057 = vmatpush.msra.mxu0 %v732
        %1058 = vmatpush.msra.mxu0 %v728
        %1059 = vmatpush.msra.mxu0 %v724
        %1060 = vmatpush.msra.mxu0 %v720
        %1061 = vmatpush.msra.mxu0 %v716
        %1062 = vmatpush.msra.mxu0 %v712
        %1063 = vmatpush.msra.mxu0 %v708
        %1064 = vmatpush.msra.mxu0 %v704
        %1065 = vmatpush.msra.mxu0 %v700
        %1066 = vmatpush.msra.mxu0 %v696
        %1067 = vmatpush.msra.mxu0 %v692
        %1068 = vmatpush.msra.mxu0 %v688
        %1069 = vmatpush.msra.mxu0 %v684
        %1070 = vmatpush.msra.mxu0 %v680
        %1071 = vmatpush.msra.mxu0 %v676
        %1072 = vmatmul.f32.gmra.mxu0 %v607
        %v1073 = vpop.f32.mrf.mxu0
        %v1074 = vadd.f32 %v1054, %v1073
        %1075 = vdwg.mxu0
        %1076 = vmatpush.msra.mxu0 %v800
        %1077 = vmatpush.msra.mxu0 %v796
        %1078 = vmatpush.msra.mxu0 %v792
        %1079 = vmatpush.msra.mxu0 %v788
        %1080 = vmatpush.msra.mxu0 %v784
        %1081 = vmatpush.msra.mxu0 %v780
        %1082 = vmatpush.msra.mxu0 %v776
        %1083 = vmatpush.msra.mxu0 %v772
        %1084 = vmatpush.msra.mxu0 %v768
        %1085 = vmatpush.msra.mxu0 %v764
        %1086 = vmatpush.msra.mxu0 %v760
        %1087 = vmatpush.msra.mxu0 %v756
        %1088 = vmatpush.msra.mxu0 %v752
        %1089 = vmatpush.msra.mxu0 %v748
        %1090 = vmatpush.msra.mxu0 %v744
        %1091 = vmatpush.msra.mxu0 %v740
        %1092 = vmatmul.f32.gmra.mxu0 %v608
        %v1093 = vpop.f32.mrf.mxu0
        %v1094 = vadd.f32 %v1074, %v1093
        %1095 = vdwg.mxu0
        %1096 = vmatpush.msra.mxu0 %v864
        %1097 = vmatpush.msra.mxu0 %v860
        %1098 = vmatpush.msra.mxu0 %v856
        %1099 = vmatpush.msra.mxu0 %v852
        %1100 = vmatpush.msra.mxu0 %v848
        %1101 = vmatpush.msra.mxu0 %v844
        %1102 = vmatpush.msra.mxu0 %v840
        %1103 = vmatpush.msra.mxu0 %v836
        %1104 = vmatpush.msra.mxu0 %v832
        %1105 = vmatpush.msra.mxu0 %v828
        %1106 = vmatpush.msra.mxu0 %v824
        %1107 = vmatpush.msra.mxu0 %v820
        %1108 = vmatpush.msra.mxu0 %v816
        %1109 = vmatpush.msra.mxu0 %v812
        %1110 = vmatpush.msra.mxu0 %v808
        %1111 = vmatpush.msra.mxu0 %v804
        %1112 = vmatmul.f32.gmra.mxu0 %v609
        %v1113 = vpop.f32.mrf.mxu0
        %v1114 = vadd.f32 %v1094, %v1113
        %1115 = vdwg.mxu0
        %1116 = vmatpush.msra.mxu0 %v673
        %1117 = vmatpush.msra.mxu0 %v669
        %1118 = vmatpush.msra.mxu0 %v665
        %1119 = vmatpush.msra.mxu0 %v661
        %1120 = vmatpush.msra.mxu0 %v657
        %1121 = vmatpush.msra.mxu0 %v653
        %1122 = vmatpush.msra.mxu0 %v649
        %1123 = vmatpush.msra.mxu0 %v645
        %1124 = vmatpush.msra.mxu0 %v641
        %1125 = vmatpush.msra.mxu0 %v637
        %1126 = vmatpush.msra.mxu0 %v633
        %1127 = vmatpush.msra.mxu0 %v629
        %1128 = vmatpush.msra.mxu0 %v625
        %1129 = vmatpush.msra.mxu0 %v621
        %1130 = vmatpush.msra.mxu0 %v617
        %1131 = vmatpush.msra.mxu0 %v613
        %1132 = vmatmul.f32.gmra.mxu0 %v606
        %v1133 = vpop.f32.mrf.mxu0
        %v1134 = vadd.f32 %v871, %v1133
        %1135 = vdwg.mxu0
        %1136 = vmatpush.msra.mxu0 %v737
        %1137 = vmatpush.msra.mxu0 %v733
        %1138 = vmatpush.msra.mxu0 %v729
        %1139 = vmatpush.msra.mxu0 %v725
        %1140 = vmatpush.msra.mxu0 %v721
        %1141 = vmatpush.msra.mxu0 %v717
        %1142 = vmatpush.msra.mxu0 %v713
        %1143 = vmatpush.msra.mxu0 %v709
        %1144 = vmatpush.msra.mxu0 %v705
        %1145 = vmatpush.msra.mxu0 %v701
        %1146 = vmatpush.msra.mxu0 %v697
        %1147 = vmatpush.msra.mxu0 %v693
        %1148 = vmatpush.msra.mxu0 %v689
        %1149 = vmatpush.msra.mxu0 %v685
        %1150 = vmatpush.msra.mxu0 %v681
        %1151 = vmatpush.msra.mxu0 %v677
        %1152 = vmatmul.f32.gmra.mxu0 %v607
        %v1153 = vpop.f32.mrf.mxu0
        %v1154 = vadd.f32 %v1134, %v1153
        %1155 = vdwg.mxu0
        %1156 = vmatpush.msra.mxu0 %v801
        %1157 = vmatpush.msra.mxu0 %v797
        %1158 = vmatpush.msra.mxu0 %v793
        %1159 = vmatpush.msra.mxu0 %v789
        %1160 = vmatpush.msra.mxu0 %v785
        %1161 = vmatpush.msra.mxu0 %v781
        %1162 = vmatpush.msra.mxu0 %v777
        %1163 = vmatpush.msra.mxu0 %v773
        %1164 = vmatpush.msra.mxu0 %v769
        %1165 = vmatpush.msra.mxu0 %v765
        %1166 = vmatpush.msra.mxu0 %v761
        %1167 = vmatpush.msra.mxu0 %v757
        %1168 = vmatpush.msra.mxu0 %v753
        %1169 = vmatpush.msra.mxu0 %v749
        %1170 = vmatpush.msra.mxu0 %v745
        %1171 = vmatpush.msra.mxu0 %v741
        %1172 = vmatmul.f32.gmra.mxu0 %v608
        %v1173 = vpop.f32.mrf.mxu0
        %v1174 = vadd.f32 %v1154, %v1173
        %1175 = vdwg.mxu0
        %1176 = vmatpush.msra.mxu0 %v865
        %1177 = vmatpush.msra.mxu0 %v861
        %1178 = vmatpush.msra.mxu0 %v857
        %1179 = vmatpush.msra.mxu0 %v853
        %1180 = vmatpush.msra.mxu0 %v849
        %1181 = vmatpush.msra.mxu0 %v845
        %1182 = vmatpush.msra.mxu0 %v841
        %1183 = vmatpush.msra.mxu0 %v837
        %1184 = vmatpush.msra.mxu0 %v833
        %1185 = vmatpush.msra.mxu0 %v829
        %1186 = vmatpush.msra.mxu0 %v825
        %1187 = vmatpush.msra.mxu0 %v821
        %1188 = vmatpush.msra.mxu0 %v817
        %1189 = vmatpush.msra.mxu0 %v813
        %1190 = vmatpush.msra.mxu0 %v809
        %1191 = vmatpush.msra.mxu0 %v805
        %1192 = vmatmul.f32.gmra.mxu0 %v609
        %v1193 = vpop.f32.mrf.mxu0
        %v1194 = vadd.f32 %v1174, %v1193
        %1195 = vdwg.mxu0
        %p1196 = scmp.lt.s32.totalorder %s35, 3
        // Predicated region
        $region93: #{tpu_custom_call.1} parent=55 // pred_check
          %p1197 = pneg %p1196
        $region94: #{tpu_custom_call.1} parent=55 // pred_check_branch
          %1199 = sbr.rel (%p1197) target = $region96
        $region95: #{tpu_custom_call.1} parent=55 // pred_region
          %v1200 = vmul.f32 %v954, 0.5
          %v1201 = vmul.f32 %v1034, 0.5
          %v1202 = vmul.f32 %v1114, 0.5
          %v1203 = vmul.f32 %v1194, 0.5
          %v1204 = vmul.f32 %v954, 0.70710677
          %v1205 = vmul.f32 %v1034, 0.70710677
          %v1206 = vmul.f32 %v1114, 0.70710677
          %v1207 = vmul.f32 %v1194, 0.70710677
          %v1208 = vand.u32 2147483647, %v1204
          %v1209 = vand.u32 2147483647, %v1205
          %v1210 = vand.u32 2147483647, %v1206
          %v1211 = vand.u32 2147483647, %v1207
          %v1212 = vmul.f32 %v1208, 0.3275911
          %v1213 = vmul.f32 %v1209, 0.3275911
          %v1214 = vmul.f32 %v1210, 0.3275911
          %v1215 = vmul.f32 %v1211, 0.3275911
          %v1216 = vadd.f32 %v1212, 1.0
          %v1217 = vadd.f32 %v1213, 1.0
          %v1218 = vadd.f32 %v1214, 1.0
          %v1219 = vadd.f32 %v1215, 1.0
          %v1220 = vrcp.pop %v1216
          %v1221 = vmul.f32 %v1216, %v1220
          %v1222 = vsub.f32 1.0, %v1221
          %v1223 = vmul.f32 %v1220, %v1222
          %v1224 = vadd.f32 %v1220, %v1223
          %vm1225 = vweird.f32 %v1216
          %vm1226 = vweird.f32 %v1220
          %vm1227 = vmor %vm1225, %vm1226
          %v1228 = vsel %vm1227, %v1220, %v1224
          %v1229 = vand.u32 2147483647, %v1216
          %vm1230 = vcmp.eq.f32.partialorder %v1229, 8.507059e+37
          %v1231 = vand.u32 %v1216, 2147483648
          %v1232 = vor.u32 1.1754944e-38, %v1231
          %v1233 = vsel %vm1230, %v1232, %v1228
          %v1234 = vrcp.pop %v1217
          %v1235 = vmul.f32 %v1217, %v1234
          %v1236 = vsub.f32 1.0, %v1235
          %v1237 = vmul.f32 %v1234, %v1236
          %v1238 = vadd.f32 %v1234, %v1237
          %vm1239 = vweird.f32 %v1217
          %vm1240 = vweird.f32 %v1234
          %vm1241 = vmor %vm1239, %vm1240
          %v1242 = vsel %vm1241, %v1234, %v1238
          %v1243 = vand.u32 2147483647, %v1217
          %vm1244 = vcmp.eq.f32.partialorder %v1243, 8.507059e+37
          %v1245 = vand.u32 %v1217, 2147483648
          %v1246 = vor.u32 1.1754944e-38, %v1245
          %v1247 = vsel %vm1244, %v1246, %v1242
          %v1248 = vrcp.pop %v1218
          %v1249 = vmul.f32 %v1218, %v1248
          %v1250 = vsub.f32 1.0, %v1249
          %v1251 = vmul.f32 %v1248, %v1250
          %v1252 = vadd.f32 %v1248, %v1251
          %vm1253 = vweird.f32 %v1218
          %vm1254 = vweird.f32 %v1248
          %vm1255 = vmor %vm1253, %vm1254
          %v1256 = vsel %vm1255, %v1248, %v1252
          %v1257 = vand.u32 2147483647, %v1218
          %vm1258 = vcmp.eq.f32.partialorder %v1257, 8.507059e+37
          %v1259 = vand.u32 %v1218, 2147483648
          %v1260 = vor.u32 1.1754944e-38, %v1259
          %v1261 = vsel %vm1258, %v1260, %v1256
          %v1262 = vrcp.pop %v1219
          %v1263 = vmul.f32 %v1219, %v1262
          %v1264 = vsub.f32 1.0, %v1263
          %v1265 = vmul.f32 %v1262, %v1264
          %v1266 = vadd.f32 %v1262, %v1265
          %vm1267 = vweird.f32 %v1219
          %vm1268 = vweird.f32 %v1262
          %vm1269 = vmor %vm1267, %vm1268
          %v1270 = vsel %vm1269, %v1262, %v1266
          %v1271 = vand.u32 2147483647, %v1219
          %vm1272 = vcmp.eq.f32.partialorder %v1271, 8.507059e+37
          %v1273 = vand.u32 %v1219, 2147483648
          %v1274 = vor.u32 1.1754944e-38, %v1273
          %v1275 = vsel %vm1272, %v1274, %v1270
          %v1276 = vmul.f32 %v1233, 1.0614054
          %v1277 = vmul.f32 %v1247, 1.0614054
          %v1278 = vmul.f32 %v1261, 1.0614054
          %v1279 = vmul.f32 %v1275, 1.0614054
          %v1280 = vsub.f32 %v1276, 1.4531521
          %v1281 = vsub.f32 %v1277, 1.4531521
          %v1282 = vsub.f32 %v1278, 1.4531521
          %v1283 = vsub.f32 %v1279, 1.4531521
          %v1284 = vmul.f32 %v1280, %v1233
          %v1285 = vmul.f32 %v1281, %v1247
          %v1286 = vmul.f32 %v1282, %v1261
          %v1287 = vmul.f32 %v1283, %v1275
          %v1288 = vadd.f32 %v1284, 1.4214138
          %v1289 = vadd.f32 %v1285, 1.4214138
          %v1290 = vadd.f32 %v1286, 1.4214138
          %v1291 = vadd.f32 %v1287, 1.4214138
          %v1292 = vmul.f32 %v1288, %v1233
          %v1293 = vmul.f32 %v1289, %v1247
          %v1294 = vmul.f32 %v1290, %v1261
          %v1295 = vmul.f32 %v1291, %v1275
          %v1296 = vsub.f32 %v1292, 0.28449672
          %v1297 = vsub.f32 %v1293, 0.28449672
          %v1298 = vsub.f32 %v1294, 0.28449672
          %v1299 = vsub.f32 %v1295, 0.28449672
          %v1300 = vmul.f32 %v1296, %v1233
          %v1301 = vmul.f32 %v1297, %v1247
          %v1302 = vmul.f32 %v1298, %v1261
          %v1303 = vmul.f32 %v1299, %v1275
          %v1304 = vadd.f32 %v1300, 0.2548296
          %v1305 = vadd.f32 %v1301, 0.2548296
          %v1306 = vadd.f32 %v1302, 0.2548296
          %v1307 = vadd.f32 %v1303, 0.2548296
          %v1308 = vmul.f32 %v1304, %v1233
          %v1309 = vmul.f32 %v1305, %v1247
          %v1310 = vmul.f32 %v1306, %v1261
          %v1311 = vmul.f32 %v1307, %v1275
          %v1312 = vsub.f32 0.0, %v1208
          %v1313 = vsub.f32 0.0, %v1209
          %v1314 = vsub.f32 0.0, %v1210
          %v1315 = vsub.f32 0.0, %v1211
          %v1316 = vmul.f32 %v1312, %v1208
          %v1317 = vmul.f32 %v1313, %v1209
          %v1318 = vmul.f32 %v1314, %v1210
          %v1319 = vmul.f32 %v1315, %v1211
          %v1320 = vmul.f32 %v1316, 1.442695
          %v1321 = vpow.pop %v1320
          %v1322 = vmul.f32 %v1317, 1.442695
          %v1323 = vpow.pop %v1322
          %v1324 = vmul.f32 %v1318, 1.442695
          %v1325 = vpow.pop %v1324
          %v1326 = vmul.f32 %v1319, 1.442695
          %v1327 = vpow.pop %v1326
          %v1328 = vmul.f32 %v1308, %v1321
          %v1329 = vmul.f32 %v1309, %v1323
          %v1330 = vmul.f32 %v1310, %v1325
          %v1331 = vmul.f32 %v1311, %v1327
          %v1332 = vsub.f32 1.0, %v1328
          %v1333 = vsub.f32 1.0, %v1329
          %v1334 = vsub.f32 1.0, %v1330
          %v1335 = vsub.f32 1.0, %v1331
          %vm1336 = vcmp.ge.f32.partialorder %v1204, 0.0
          %vm1337 = vcmp.ge.f32.partialorder %v1205, 0.0
          %vm1338 = vcmp.ge.f32.partialorder %v1206, 0.0
          %vm1339 = vcmp.ge.f32.partialorder %v1207, 0.0
          %v1340 = vsub.f32 0.0, %v1332
          %v1341 = vsub.f32 0.0, %v1333
          %v1342 = vsub.f32 0.0, %v1334
          %v1343 = vsub.f32 0.0, %v1335
          %v1344 = vsel %vm1336, %v1332, %v1340
          %v1345 = vsel %vm1337, %v1333, %v1341
          %v1346 = vsel %vm1338, %v1334, %v1342
          %v1347 = vsel %vm1339, %v1335, %v1343
          %v1348 = vadd.f32 %v1344, 1.0
          %v1349 = vadd.f32 %v1345, 1.0
          %v1350 = vadd.f32 %v1346, 1.0
          %v1351 = vadd.f32 %v1347, 1.0
          %v1352 = vmul.f32 %v1200, %v1348
          %v1353 = vmul.f32 %v1201, %v1349
          %v1354 = vmul.f32 %v1202, %v1350
          %v1355 = vmul.f32 %v1203, %v1351
          %1356 = vst [vmem:[#allocation2] sm:$0xff] %v1352
          %1357 = vst [vmem:[#allocation2 + $0x8] sm:$0xff] %v1353
          %1358 = vst [vmem:[#allocation2 + $0x10] sm:$0xff] %v1354
          %1359 = vst [vmem:[#allocation2 + $0x18] sm:$0xff] %v1355
        $region96: #{tpu_custom_call.1} parent=55 // pred_fallthru
          _
        %p1360 = scmp.eq.s32.totalorder %s35, 3
        // Predicated region
        $region97: #{tpu_custom_call.1} parent=55 // pred_check
          %p1361 = pneg %p1360
        $region98: #{tpu_custom_call.1} parent=55 // pred_check_branch
          %1363 = sbr.rel (%p1361) target = $region100
        $region99: #{tpu_custom_call.1} parent=55 // pred_region
          %1365 = vrot.lane.b32.xlu0 %v954, 96
          %v1366 = vpop.permute.xlu0 %1365
          %1367 = vrot.lane.b32.xlu0 %v954, 64
          %v1368 = vpop.permute.xlu0 %1367
          %1369 = vrot.lane.b32.xlu0 %v954, 32
          %v1370 = vpop.permute.xlu0 %1369
          %1372 = vrot.lane.b32.xlu0 %v1034, 96
          %v1373 = vpop.permute.xlu0 %1372
          %1374 = vrot.lane.b32.xlu0 %v1034, 64
          %v1375 = vpop.permute.xlu0 %1374
          %1376 = vrot.lane.b32.xlu0 %v1034, 32
          %v1377 = vpop.permute.xlu0 %1376
          %1379 = vrot.lane.b32.xlu0 %v1114, 96
          %v1380 = vpop.permute.xlu0 %1379
          %1381 = vrot.lane.b32.xlu0 %v1114, 64
          %v1382 = vpop.permute.xlu0 %1381
          %1383 = vrot.lane.b32.xlu0 %v1114, 32
          %v1384 = vpop.permute.xlu0 %1383
          %1386 = vrot.lane.b32.xlu0 %v1194, 96
          %v1387 = vpop.permute.xlu0 %1386
          %1388 = vrot.lane.b32.xlu0 %v1194, 64
          %v1389 = vpop.permute.xlu0 %1388
          %1390 = vrot.lane.b32.xlu0 %v1194, 32
          %v1391 = vpop.permute.xlu0 %1390
          %v1392 = vld [vmem:[#allocation13] sm:$0xff]
          %v1393 = vld [vmem:[#allocation13 + $0x8] sm:$0xff]
          %v1394 = vld [vmem:[#allocation13 + $0x10] sm:$0xff]
          %v1395 = vld [vmem:[#allocation13 + $0x18] sm:$0xff]
          %v1396 = vld [vmem:[#allocation15] sm:$0x1]
          %v1398 = vperm.slane %v1396, 0
          %vm1400 = vcmask 261120
          %v1401 = vsel %vm1400, %v954, 0
          %v1403 = vsel %vm1400, %v1366, 0
          %v1405 = vsel %vm1400, %v1368, 0
          %v1407 = vsel %vm1400, %v1370, 0
          %v1409 = vsel %vm1400, %v1034, 0
          %v1411 = vsel %vm1400, %v1373, 0
          %v1413 = vsel %vm1400, %v1375, 0
          %v1415 = vsel %vm1400, %v1377, 0
          %v1417 = vsel %vm1400, %v1114, 0
          %v1419 = vsel %vm1400, %v1380, 0
          %v1421 = vsel %vm1400, %v1382, 0
          %v1423 = vsel %vm1400, %v1384, 0
          %v1425 = vsel %vm1400, %v1194, 0
          %v1427 = vsel %vm1400, %v1387, 0
          %v1429 = vsel %vm1400, %v1389, 0
          %v1431 = vsel %vm1400, %v1391, 0
          %1433 = vmatpush.msra.mxu0 0.0
          %1434 = vmatpush.msra.mxu0 0.0
          %1435 = vmatpush.msra.mxu0 0.0
          %1436 = vmatpush.msra.mxu0 0.0
          %1437 = vmatpush.msra.mxu0 0.0
          %1438 = vmatpush.msra.mxu0 0.0
          %1439 = vmatpush.msra.mxu0 0.0
          %1440 = vmatpush.msra.mxu0 0.0
          %1441 = vmatpush.msra.mxu0 0.0
          %1442 = vmatpush.msra.mxu0 0.0
          %1443 = vmatpush.msra.mxu0 0.0
          %1444 = vmatpush.msra.mxu0 0.0
          %1445 = vmatpush.msra.mxu0 %v1395
          %1446 = vmatpush.msra.mxu0 %v1394
          %1447 = vmatpush.msra.mxu0 %v1393
          %1448 = vmatpush.msra.mxu0 %v1392
          %1449 = vmatmul.f32.gmra.mxu0 %v1401
          %v1450 = vpop.f32.mrf.mxu0
          %v1451 = vadd.f32 %v1398, %v1450
          %1452 = vmatmul.f32.gmra.mxu0 %v1403
          %v1453 = vpop.f32.mrf.mxu0
          %v1454 = vadd.f32 %v1398, %v1453
          %1455 = vmatmul.f32.gmra.mxu0 %v1405
          %v1456 = vpop.f32.mrf.mxu0
          %v1457 = vadd.f32 %v1398, %v1456
          %1458 = vmatmul.f32.gmra.mxu0 %v1407
          %v1459 = vpop.f32.mrf.mxu0
          %v1460 = vadd.f32 %v1398, %v1459
          %1461 = vmatmul.f32.gmra.mxu0 %v1409
          %v1462 = vpop.f32.mrf.mxu0
          %v1463 = vadd.f32 %v1398, %v1462
          %1464 = vmatmul.f32.gmra.mxu0 %v1411
          %v1465 = vpop.f32.mrf.mxu0
          %v1466 = vadd.f32 %v1398, %v1465
          %1467 = vmatmul.f32.gmra.mxu0 %v1413
          %v1468 = vpop.f32.mrf.mxu0
          %v1469 = vadd.f32 %v1398, %v1468
          %1470 = vmatmul.f32.gmra.mxu0 %v1415
          %v1471 = vpop.f32.mrf.mxu0
          %v1472 = vadd.f32 %v1398, %v1471
          %1473 = vmatmul.f32.gmra.mxu0 %v1417
          %v1474 = vpop.f32.mrf.mxu0
          %v1475 = vadd.f32 %v1398, %v1474
          %1476 = vmatmul.f32.gmra.mxu0 %v1419
          %v1477 = vpop.f32.mrf.mxu0
          %v1478 = vadd.f32 %v1398, %v1477
          %1479 = vmatmul.f32.gmra.mxu0 %v1421
          %v1480 = vpop.f32.mrf.mxu0
          %v1481 = vadd.f32 %v1398, %v1480
          %1482 = vmatmul.f32.gmra.mxu0 %v1423
          %v1483 = vpop.f32.mrf.mxu0
          %v1484 = vadd.f32 %v1398, %v1483
          %1485 = vmatmul.f32.gmra.mxu0 %v1425
          %v1486 = vpop.f32.mrf.mxu0
          %v1487 = vadd.f32 %v1398, %v1486
          %1488 = vmatmul.f32.gmra.mxu0 %v1427
          %v1489 = vpop.f32.mrf.mxu0
          %v1490 = vadd.f32 %v1398, %v1489
          %1491 = vmatmul.f32.gmra.mxu0 %v1429
          %v1492 = vpop.f32.mrf.mxu0
          %v1493 = vadd.f32 %v1398, %v1492
          %1494 = vmatmul.f32.gmra.mxu0 %v1431
          %v1495 = vpop.f32.mrf.mxu0
          %v1496 = vadd.f32 %v1398, %v1495
          %1497 = vdwg.mxu0
          %v1498 = vmul.f32 %v1451, 0.5
          %v1499 = vmul.f32 %v1454, 0.5
          %v1500 = vmul.f32 %v1457, 0.5
          %v1501 = vmul.f32 %v1460, 0.5
          %v1502 = vmul.f32 %v1463, 0.5
          %v1503 = vmul.f32 %v1466, 0.5
          %v1504 = vmul.f32 %v1469, 0.5
          %v1505 = vmul.f32 %v1472, 0.5
          %v1506 = vmul.f32 %v1475, 0.5
          %v1507 = vmul.f32 %v1478, 0.5
          %v1508 = vmul.f32 %v1481, 0.5
          %v1509 = vmul.f32 %v1484, 0.5
          %v1510 = vmul.f32 %v1487, 0.5
          %v1511 = vmul.f32 %v1490, 0.5
          %v1512 = vmul.f32 %v1493, 0.5
          %v1513 = vmul.f32 %v1496, 0.5
          %v1514 = vmul.f32 %v1451, 0.70710677
          %v1515 = vmul.f32 %v1454, 0.70710677
          %v1516 = vmul.f32 %v1457, 0.70710677
          %v1517 = vmul.f32 %v1460, 0.70710677
          %v1518 = vmul.f32 %v1463, 0.70710677
          %v1519 = vmul.f32 %v1466, 0.70710677
          %v1520 = vmul.f32 %v1469, 0.70710677
          %v1521 = vmul.f32 %v1472, 0.70710677
          %v1522 = vmul.f32 %v1475, 0.70710677
          %v1523 = vmul.f32 %v1478, 0.70710677
          %v1524 = vmul.f32 %v1481, 0.70710677
          %v1525 = vmul.f32 %v1484, 0.70710677
          %v1526 = vmul.f32 %v1487, 0.70710677
          %v1527 = vmul.f32 %v1490, 0.70710677
          %v1528 = vmul.f32 %v1493, 0.70710677
          %v1529 = vmul.f32 %v1496, 0.70710677
          %v1530 = vand.u32 2147483647, %v1514
          %v1531 = vand.u32 2147483647, %v1515
          %v1532 = vand.u32 2147483647, %v1516
          %v1533 = vand.u32 2147483647, %v1517
          %v1534 = vand.u32 2147483647, %v1518
          %v1535 = vand.u32 2147483647, %v1519
          %v1536 = vand.u32 2147483647, %v1520
          %v1537 = vand.u32 2147483647, %v1521
          %v1538 = vand.u32 2147483647, %v1522
          %v1539 = vand.u32 2147483647, %v1523
          %v1540 = vand.u32 2147483647, %v1524
          %v1541 = vand.u32 2147483647, %v1525
          %v1542 = vand.u32 2147483647, %v1526
          %v1543 = vand.u32 2147483647, %v1527
          %v1544 = vand.u32 2147483647, %v1528
          %v1545 = vand.u32 2147483647, %v1529
          %v1546 = vmul.f32 %v1530, 0.3275911
          %v1547 = vmul.f32 %v1531, 0.3275911
          %v1548 = vmul.f32 %v1532, 0.3275911
          %v1549 = vmul.f32 %v1533, 0.3275911
          %v1550 = vmul.f32 %v1534, 0.3275911
          %v1551 = vmul.f32 %v1535, 0.3275911
          %v1552 = vmul.f32 %v1536, 0.3275911
          %v1553 = vmul.f32 %v1537, 0.3275911
          %v1554 = vmul.f32 %v1538, 0.3275911
          %v1555 = vmul.f32 %v1539, 0.3275911
          %v1556 = vmul.f32 %v1540, 0.3275911
          %v1557 = vmul.f32 %v1541, 0.3275911
          %v1558 = vmul.f32 %v1542, 0.3275911
          %v1559 = vmul.f32 %v1543, 0.3275911
          %v1560 = vmul.f32 %v1544, 0.3275911
          %v1561 = vmul.f32 %v1545, 0.3275911
          %v1562 = vadd.f32 %v1546, 1.0
          %v1563 = vadd.f32 %v1547, 1.0
          %v1564 = vadd.f32 %v1548, 1.0
          %v1565 = vadd.f32 %v1549, 1.0
          %v1566 = vadd.f32 %v1550, 1.0
          %v1567 = vadd.f32 %v1551, 1.0
          %v1568 = vadd.f32 %v1552, 1.0
          %v1569 = vadd.f32 %v1553, 1.0
          %v1570 = vadd.f32 %v1554, 1.0
          %v1571 = vadd.f32 %v1555, 1.0
          %v1572 = vadd.f32 %v1556, 1.0
          %v1573 = vadd.f32 %v1557, 1.0
          %v1574 = vadd.f32 %v1558, 1.0
          %v1575 = vadd.f32 %v1559, 1.0
          %v1576 = vadd.f32 %v1560, 1.0
          %v1577 = vadd.f32 %v1561, 1.0
          %v1578 = vrcp.pop %v1562
          %v1579 = vmul.f32 %v1562, %v1578
          %v1580 = vsub.f32 1.0, %v1579
          %v1581 = vmul.f32 %v1578, %v1580
          %v1582 = vadd.f32 %v1578, %v1581
          %vm1583 = vweird.f32 %v1562
          %vm1584 = vweird.f32 %v1578
          %vm1585 = vmor %vm1583, %vm1584
          %v1586 = vsel %vm1585, %v1578, %v1582
          %v1587 = vand.u32 2147483647, %v1562
          %vm1588 = vcmp.eq.f32.partialorder %v1587, 8.507059e+37
          %v1589 = vand.u32 %v1562, 2147483648
          %v1590 = vor.u32 1.1754944e-38, %v1589
          %v1591 = vsel %vm1588, %v1590, %v1586
          %v1592 = vrcp.pop %v1563
          %v1593 = vmul.f32 %v1563, %v1592
          %v1594 = vsub.f32 1.0, %v1593
          %v1595 = vmul.f32 %v1592, %v1594
          %v1596 = vadd.f32 %v1592, %v1595
          %vm1597 = vweird.f32 %v1563
          %vm1598 = vweird.f32 %v1592
          %vm1599 = vmor %vm1597, %vm1598
          %v1600 = vsel %vm1599, %v1592, %v1596
          %v1601 = vand.u32 2147483647, %v1563
          %vm1602 = vcmp.eq.f32.partialorder %v1601, 8.507059e+37
          %v1603 = vand.u32 %v1563, 2147483648
          %v1604 = vor.u32 1.1754944e-38, %v1603
          %v1605 = vsel %vm1602, %v1604, %v1600
          %v1606 = vrcp.pop %v1564
          %v1607 = vmul.f32 %v1564, %v1606
          %v1608 = vsub.f32 1.0, %v1607
          %v1609 = vmul.f32 %v1606, %v1608
          %v1610 = vadd.f32 %v1606, %v1609
          %vm1611 = vweird.f32 %v1564
          %vm1612 = vweird.f32 %v1606
          %vm1613 = vmor %vm1611, %vm1612
          %v1614 = vsel %vm1613, %v1606, %v1610
          %v1615 = vand.u32 2147483647, %v1564
          %vm1616 = vcmp.eq.f32.partialorder %v1615, 8.507059e+37
          %v1617 = vand.u32 %v1564, 2147483648
          %v1618 = vor.u32 1.1754944e-38, %v1617
          %v1619 = vsel %vm1616, %v1618, %v1614
          %v1620 = vrcp.pop %v1565
          %v1621 = vmul.f32 %v1565, %v1620
          %v1622 = vsub.f32 1.0, %v1621
          %v1623 = vmul.f32 %v1620, %v1622
          %v1624 = vadd.f32 %v1620, %v1623
          %vm1625 = vweird.f32 %v1565
          %vm1626 = vweird.f32 %v1620
          %vm1627 = vmor %vm1625, %vm1626
          %v1628 = vsel %vm1627, %v1620, %v1624
          %v1629 = vand.u32 2147483647, %v1565
          %vm1630 = vcmp.eq.f32.partialorder %v1629, 8.507059e+37
          %v1631 = vand.u32 %v1565, 2147483648
          %v1632 = vor.u32 1.1754944e-38, %v1631
          %v1633 = vsel %vm1630, %v1632, %v1628
          %v1634 = vrcp.pop %v1566
          %v1635 = vmul.f32 %v1566, %v1634
          %v1636 = vsub.f32 1.0, %v1635
          %v1637 = vmul.f32 %v1634, %v1636
          %v1638 = vadd.f32 %v1634, %v1637
          %vm1639 = vweird.f32 %v1566
          %vm1640 = vweird.f32 %v1634
          %vm1641 = vmor %vm1639, %vm1640
          %v1642 = vsel %vm1641, %v1634, %v1638
          %v1643 = vand.u32 2147483647, %v1566
          %vm1644 = vcmp.eq.f32.partialorder %v1643, 8.507059e+37
          %v1645 = vand.u32 %v1566, 2147483648
          %v1646 = vor.u32 1.1754944e-38, %v1645
          %v1647 = vsel %vm1644, %v1646, %v1642
          %v1648 = vrcp.pop %v1567
          %v1649 = vmul.f32 %v1567, %v1648
          %v1650 = vsub.f32 1.0, %v1649
          %v1651 = vmul.f32 %v1648, %v1650
          %v1652 = vadd.f32 %v1648, %v1651
          %vm1653 = vweird.f32 %v1567
          %vm1654 = vweird.f32 %v1648
          %vm1655 = vmor %vm1653, %vm1654
          %v1656 = vsel %vm1655, %v1648, %v1652
          %v1657 = vand.u32 2147483647, %v1567
          %vm1658 = vcmp.eq.f32.partialorder %v1657, 8.507059e+37
          %v1659 = vand.u32 %v1567, 2147483648
          %v1660 = vor.u32 1.1754944e-38, %v1659
          %v1661 = vsel %vm1658, %v1660, %v1656
          %v1662 = vrcp.pop %v1568
          %v1663 = vmul.f32 %v1568, %v1662
          %v1664 = vsub.f32 1.0, %v1663
          %v1665 = vmul.f32 %v1662, %v1664
          %v1666 = vadd.f32 %v1662, %v1665
          %vm1667 = vweird.f32 %v1568
          %vm1668 = vweird.f32 %v1662
          %vm1669 = vmor %vm1667, %vm1668
          %v1670 = vsel %vm1669, %v1662, %v1666
          %v1671 = vand.u32 2147483647, %v1568
          %vm1672 = vcmp.eq.f32.partialorder %v1671, 8.507059e+37
          %v1673 = vand.u32 %v1568, 2147483648
          %v1674 = vor.u32 1.1754944e-38, %v1673
          %v1675 = vsel %vm1672, %v1674, %v1670
          %v1676 = vrcp.pop %v1569
          %v1677 = vmul.f32 %v1569, %v1676
          %v1678 = vsub.f32 1.0, %v1677
          %v1679 = vmul.f32 %v1676, %v1678
          %v1680 = vadd.f32 %v1676, %v1679
          %vm1681 = vweird.f32 %v1569
          %vm1682 = vweird.f32 %v1676
          %vm1683 = vmor %vm1681, %vm1682
          %v1684 = vsel %vm1683, %v1676, %v1680
          %v1685 = vand.u32 2147483647, %v1569
          %vm1686 = vcmp.eq.f32.partialorder %v1685, 8.507059e+37
          %v1687 = vand.u32 %v1569, 2147483648
          %v1688 = vor.u32 1.1754944e-38, %v1687
          %v1689 = vsel %vm1686, %v1688, %v1684
          %v1690 = vrcp.pop %v1570
          %v1691 = vmul.f32 %v1570, %v1690
          %v1692 = vsub.f32 1.0, %v1691
          %v1693 = vmul.f32 %v1690, %v1692
          %v1694 = vadd.f32 %v1690, %v1693
          %vm1695 = vweird.f32 %v1570
          %vm1696 = vweird.f32 %v1690
          %vm1697 = vmor %vm1695, %vm1696
          %v1698 = vsel %vm1697, %v1690, %v1694
          %v1699 = vand.u32 2147483647, %v1570
          %vm1700 = vcmp.eq.f32.partialorder %v1699, 8.507059e+37
          %v1701 = vand.u32 %v1570, 2147483648
          %v1702 = vor.u32 1.1754944e-38, %v1701
          %v1703 = vsel %vm1700, %v1702, %v1698
          %v1704 = vrcp.pop %v1571
          %v1705 = vmul.f32 %v1571, %v1704
          %v1706 = vsub.f32 1.0, %v1705
          %v1707 = vmul.f32 %v1704, %v1706
          %v1708 = vadd.f32 %v1704, %v1707
          %vm1709 = vweird.f32 %v1571
          %vm1710 = vweird.f32 %v1704
          %vm1711 = vmor %vm1709, %vm1710
          %v1712 = vsel %vm1711, %v1704, %v1708
          %v1713 = vand.u32 2147483647, %v1571
          %vm1714 = vcmp.eq.f32.partialorder %v1713, 8.507059e+37
          %v1715 = vand.u32 %v1571, 2147483648
          %v1716 = vor.u32 1.1754944e-38, %v1715
          %v1717 = vsel %vm1714, %v1716, %v1712
          %v1718 = vrcp.pop %v1572
          %v1719 = vmul.f32 %v1572, %v1718
          %v1720 = vsub.f32 1.0, %v1719
          %v1721 = vmul.f32 %v1718, %v1720
          %v1722 = vadd.f32 %v1718, %v1721
          %vm1723 = vweird.f32 %v1572
          %vm1724 = vweird.f32 %v1718
          %vm1725 = vmor %vm1723, %vm1724
          %v1726 = vsel %vm1725, %v1718, %v1722
          %v1727 = vand.u32 2147483647, %v1572
          %vm1728 = vcmp.eq.f32.partialorder %v1727, 8.507059e+37
          %v1729 = vand.u32 %v1572, 2147483648
          %v1730 = vor.u32 1.1754944e-38, %v1729
          %v1731 = vsel %vm1728, %v1730, %v1726
          %v1732 = vrcp.pop %v1573
          %v1733 = vmul.f32 %v1573, %v1732
          %v1734 = vsub.f32 1.0, %v1733
          %v1735 = vmul.f32 %v1732, %v1734
          %v1736 = vadd.f32 %v1732, %v1735
          %vm1737 = vweird.f32 %v1573
          %vm1738 = vweird.f32 %v1732
          %vm1739 = vmor %vm1737, %vm1738
          %v1740 = vsel %vm1739, %v1732, %v1736
          %v1741 = vand.u32 2147483647, %v1573
          %vm1742 = vcmp.eq.f32.partialorder %v1741, 8.507059e+37
          %v1743 = vand.u32 %v1573, 2147483648
          %v1744 = vor.u32 1.1754944e-38, %v1743
          %v1745 = vsel %vm1742, %v1744, %v1740
          %v1746 = vrcp.pop %v1574
          %v1747 = vmul.f32 %v1574, %v1746
          %v1748 = vsub.f32 1.0, %v1747
          %v1749 = vmul.f32 %v1746, %v1748
          %v1750 = vadd.f32 %v1746, %v1749
          %vm1751 = vweird.f32 %v1574
          %vm1752 = vweird.f32 %v1746
          %vm1753 = vmor %vm1751, %vm1752
          %v1754 = vsel %vm1753, %v1746, %v1750
          %v1755 = vand.u32 2147483647, %v1574
          %vm1756 = vcmp.eq.f32.partialorder %v1755, 8.507059e+37
          %v1757 = vand.u32 %v1574, 2147483648
          %v1758 = vor.u32 1.1754944e-38, %v1757
          %v1759 = vsel %vm1756, %v1758, %v1754
          %v1760 = vrcp.pop %v1575
          %v1761 = vmul.f32 %v1575, %v1760
          %v1762 = vsub.f32 1.0, %v1761
          %v1763 = vmul.f32 %v1760, %v1762
          %v1764 = vadd.f32 %v1760, %v1763
          %vm1765 = vweird.f32 %v1575
          %vm1766 = vweird.f32 %v1760
          %vm1767 = vmor %vm1765, %vm1766
          %v1768 = vsel %vm1767, %v1760, %v1764
          %v1769 = vand.u32 2147483647, %v1575
          %vm1770 = vcmp.eq.f32.partialorder %v1769, 8.507059e+37
          %v1771 = vand.u32 %v1575, 2147483648
          %v1772 = vor.u32 1.1754944e-38, %v1771
          %v1773 = vsel %vm1770, %v1772, %v1768
          %v1774 = vrcp.pop %v1576
          %v1775 = vmul.f32 %v1576, %v1774
          %v1776 = vsub.f32 1.0, %v1775
          %v1777 = vmul.f32 %v1774, %v1776
          %v1778 = vadd.f32 %v1774, %v1777
          %vm1779 = vweird.f32 %v1576
          %vm1780 = vweird.f32 %v1774
          %vm1781 = vmor %vm1779, %vm1780
          %v1782 = vsel %vm1781, %v1774, %v1778
          %v1783 = vand.u32 2147483647, %v1576
          %vm1784 = vcmp.eq.f32.partialorder %v1783, 8.507059e+37
          %v1785 = vand.u32 %v1576, 2147483648
          %v1786 = vor.u32 1.1754944e-38, %v1785
          %v1787 = vsel %vm1784, %v1786, %v1782
          %v1788 = vrcp.pop %v1577
          %v1789 = vmul.f32 %v1577, %v1788
          %v1790 = vsub.f32 1.0, %v1789
          %v1791 = vmul.f32 %v1788, %v1790
          %v1792 = vadd.f32 %v1788, %v1791
          %vm1793 = vweird.f32 %v1577
          %vm1794 = vweird.f32 %v1788
          %vm1795 = vmor %vm1793, %vm1794
          %v1796 = vsel %vm1795, %v1788, %v1792
          %v1797 = vand.u32 2147483647, %v1577
          %vm1798 = vcmp.eq.f32.partialorder %v1797, 8.507059e+37
          %v1799 = vand.u32 %v1577, 2147483648
          %v1800 = vor.u32 1.1754944e-38, %v1799
          %v1801 = vsel %vm1798, %v1800, %v1796
          %v1802 = vmul.f32 %v1591, 1.0614054
          %v1803 = vmul.f32 %v1605, 1.0614054
          %v1804 = vmul.f32 %v1619, 1.0614054
          %v1805 = vmul.f32 %v1633, 1.0614054
          %v1806 = vmul.f32 %v1647, 1.0614054
          %v1807 = vmul.f32 %v1661, 1.0614054
          %v1808 = vmul.f32 %v1675, 1.0614054
          %v1809 = vmul.f32 %v1689, 1.0614054
          %v1810 = vmul.f32 %v1703, 1.0614054
          %v1811 = vmul.f32 %v1717, 1.0614054
          %v1812 = vmul.f32 %v1731, 1.0614054
          %v1813 = vmul.f32 %v1745, 1.0614054
          %v1814 = vmul.f32 %v1759, 1.0614054
          %v1815 = vmul.f32 %v1773, 1.0614054
          %v1816 = vmul.f32 %v1787, 1.0614054
          %v1817 = vmul.f32 %v1801, 1.0614054
          %v1818 = vsub.f32 %v1802, 1.4531521
          %v1819 = vsub.f32 %v1803, 1.4531521
          %v1820 = vsub.f32 %v1804, 1.4531521
          %v1821 = vsub.f32 %v1805, 1.4531521
          %v1822 = vsub.f32 %v1806, 1.4531521
          %v1823 = vsub.f32 %v1807, 1.4531521
          %v1824 = vsub.f32 %v1808, 1.4531521
          %v1825 = vsub.f32 %v1809, 1.4531521
          %v1826 = vsub.f32 %v1810, 1.4531521
          %v1827 = vsub.f32 %v1811, 1.4531521
          %v1828 = vsub.f32 %v1812, 1.4531521
          %v1829 = vsub.f32 %v1813, 1.4531521
          %v1830 = vsub.f32 %v1814, 1.4531521
          %v1831 = vsub.f32 %v1815, 1.4531521
          %v1832 = vsub.f32 %v1816, 1.4531521
          %v1833 = vsub.f32 %v1817, 1.4531521
          %v1834 = vmul.f32 %v1818, %v1591
          %v1835 = vmul.f32 %v1819, %v1605
          %v1836 = vmul.f32 %v1820, %v1619
          %v1837 = vmul.f32 %v1821, %v1633
          %v1838 = vmul.f32 %v1822, %v1647
          %v1839 = vmul.f32 %v1823, %v1661
          %v1840 = vmul.f32 %v1824, %v1675
          %v1841 = vmul.f32 %v1825, %v1689
          %v1842 = vmul.f32 %v1826, %v1703
          %v1843 = vmul.f32 %v1827, %v1717
          %v1844 = vmul.f32 %v1828, %v1731
          %v1845 = vmul.f32 %v1829, %v1745
          %v1846 = vmul.f32 %v1830, %v1759
          %v1847 = vmul.f32 %v1831, %v1773
          %v1848 = vmul.f32 %v1832, %v1787
          %v1849 = vmul.f32 %v1833, %v1801
          %v1850 = vadd.f32 %v1834, 1.4214138
          %v1851 = vadd.f32 %v1835, 1.4214138
          %v1852 = vadd.f32 %v1836, 1.4214138
          %v1853 = vadd.f32 %v1837, 1.4214138
          %v1854 = vadd.f32 %v1838, 1.4214138
          %v1855 = vadd.f32 %v1839, 1.4214138
          %v1856 = vadd.f32 %v1840, 1.4214138
          %v1857 = vadd.f32 %v1841, 1.4214138
          %v1858 = vadd.f32 %v1842, 1.4214138
          %v1859 = vadd.f32 %v1843, 1.4214138
          %v1860 = vadd.f32 %v1844, 1.4214138
          %v1861 = vadd.f32 %v1845, 1.4214138
          %v1862 = vadd.f32 %v1846, 1.4214138
          %v1863 = vadd.f32 %v1847, 1.4214138
          %v1864 = vadd.f32 %v1848, 1.4214138
          %v1865 = vadd.f32 %v1849, 1.4214138
          %v1866 = vmul.f32 %v1850, %v1591
          %v1867 = vmul.f32 %v1851, %v1605
          %v1868 = vmul.f32 %v1852, %v1619
          %v1869 = vmul.f32 %v1853, %v1633
          %v1870 = vmul.f32 %v1854, %v1647
          %v1871 = vmul.f32 %v1855, %v1661
          %v1872 = vmul.f32 %v1856, %v1675
          %v1873 = vmul.f32 %v1857, %v1689
          %v1874 = vmul.f32 %v1858, %v1703
          %v1875 = vmul.f32 %v1859, %v1717
          %v1876 = vmul.f32 %v1860, %v1731
          %v1877 = vmul.f32 %v1861, %v1745
          %v1878 = vmul.f32 %v1862, %v1759
          %v1879 = vmul.f32 %v1863, %v1773
          %v1880 = vmul.f32 %v1864, %v1787
          %v1881 = vmul.f32 %v1865, %v1801
          %v1882 = vsub.f32 %v1866, 0.28449672
          %v1883 = vsub.f32 %v1867, 0.28449672
          %v1884 = vsub.f32 %v1868, 0.28449672
          %v1885 = vsub.f32 %v1869, 0.28449672
          %v1886 = vsub.f32 %v1870, 0.28449672
          %v1887 = vsub.f32 %v1871, 0.28449672
          %v1888 = vsub.f32 %v1872, 0.28449672
          %v1889 = vsub.f32 %v1873, 0.28449672
          %v1890 = vsub.f32 %v1874, 0.28449672
          %v1891 = vsub.f32 %v1875, 0.28449672
          %v1892 = vsub.f32 %v1876, 0.28449672
          %v1893 = vsub.f32 %v1877, 0.28449672
          %v1894 = vsub.f32 %v1878, 0.28449672
          %v1895 = vsub.f32 %v1879, 0.28449672
          %v1896 = vsub.f32 %v1880, 0.28449672
          %v1897 = vsub.f32 %v1881, 0.28449672
          %v1898 = vmul.f32 %v1882, %v1591
          %v1899 = vmul.f32 %v1883, %v1605
          %v1900 = vmul.f32 %v1884, %v1619
          %v1901 = vmul.f32 %v1885, %v1633
          %v1902 = vmul.f32 %v1886, %v1647
          %v1903 = vmul.f32 %v1887, %v1661
          %v1904 = vmul.f32 %v1888, %v1675
          %v1905 = vmul.f32 %v1889, %v1689
          %v1906 = vmul.f32 %v1890, %v1703
          %v1907 = vmul.f32 %v1891, %v1717
          %v1908 = vmul.f32 %v1892, %v1731
          %v1909 = vmul.f32 %v1893, %v1745
          %v1910 = vmul.f32 %v1894, %v1759
          %v1911 = vmul.f32 %v1895, %v1773
          %v1912 = vmul.f32 %v1896, %v1787
          %v1913 = vmul.f32 %v1897, %v1801
          %v1914 = vadd.f32 %v1898, 0.2548296
          %v1915 = vadd.f32 %v1899, 0.2548296
          %v1916 = vadd.f32 %v1900, 0.2548296
          %v1917 = vadd.f32 %v1901, 0.2548296
          %v1918 = vadd.f32 %v1902, 0.2548296
          %v1919 = vadd.f32 %v1903, 0.2548296
          %v1920 = vadd.f32 %v1904, 0.2548296
          %v1921 = vadd.f32 %v1905, 0.2548296
          %v1922 = vadd.f32 %v1906, 0.2548296
          %v1923 = vadd.f32 %v1907, 0.2548296
          %v1924 = vadd.f32 %v1908, 0.2548296
          %v1925 = vadd.f32 %v1909, 0.2548296
          %v1926 = vadd.f32 %v1910, 0.2548296
          %v1927 = vadd.f32 %v1911, 0.2548296
          %v1928 = vadd.f32 %v1912, 0.2548296
          %v1929 = vadd.f32 %v1913, 0.2548296
          %v1930 = vmul.f32 %v1914, %v1591
          %v1931 = vmul.f32 %v1915, %v1605
          %v1932 = vmul.f32 %v1916, %v1619
          %v1933 = vmul.f32 %v1917, %v1633
          %v1934 = vmul.f32 %v1918, %v1647
          %v1935 = vmul.f32 %v1919, %v1661
          %v1936 = vmul.f32 %v1920, %v1675
          %v1937 = vmul.f32 %v1921, %v1689
          %v1938 = vmul.f32 %v1922, %v1703
          %v1939 = vmul.f32 %v1923, %v1717
          %v1940 = vmul.f32 %v1924, %v1731
          %v1941 = vmul.f32 %v1925, %v1745
          %v1942 = vmul.f32 %v1926, %v1759
          %v1943 = vmul.f32 %v1927, %v1773
          %v1944 = vmul.f32 %v1928, %v1787
          %v1945 = vmul.f32 %v1929, %v1801
          %v1946 = vsub.f32 0.0, %v1530
          %v1947 = vsub.f32 0.0, %v1531
          %v1948 = vsub.f32 0.0, %v1532
          %v1949 = vsub.f32 0.0, %v1533
          %v1950 = vsub.f32 0.0, %v1534
          %v1951 = vsub.f32 0.0, %v1535
          %v1952 = vsub.f32 0.0, %v1536
          %v1953 = vsub.f32 0.0, %v1537
          %v1954 = vsub.f32 0.0, %v1538
          %v1955 = vsub.f32 0.0, %v1539
          %v1956 = vsub.f32 0.0, %v1540
          %v1957 = vsub.f32 0.0, %v1541
          %v1958 = vsub.f32 0.0, %v1542
          %v1959 = vsub.f32 0.0, %v1543
          %v1960 = vsub.f32 0.0, %v1544
          %v1961 = vsub.f32 0.0, %v1545
          %v1962 = vmul.f32 %v1946, %v1530
          %v1963 = vmul.f32 %v1947, %v1531
          %v1964 = vmul.f32 %v1948, %v1532
          %v1965 = vmul.f32 %v1949, %v1533
          %v1966 = vmul.f32 %v1950, %v1534
          %v1967 = vmul.f32 %v1951, %v1535
          %v1968 = vmul.f32 %v1952, %v1536
          %v1969 = vmul.f32 %v1953, %v1537
          %v1970 = vmul.f32 %v1954, %v1538
          %v1971 = vmul.f32 %v1955, %v1539
          %v1972 = vmul.f32 %v1956, %v1540
          %v1973 = vmul.f32 %v1957, %v1541
          %v1974 = vmul.f32 %v1958, %v1542
          %v1975 = vmul.f32 %v1959, %v1543
          %v1976 = vmul.f32 %v1960, %v1544
          %v1977 = vmul.f32 %v1961, %v1545
          %v1978 = vmul.f32 %v1962, 1.442695
          %v1979 = vpow.pop %v1978
          %v1980 = vmul.f32 %v1963, 1.442695
          %v1981 = vpow.pop %v1980
          %v1982 = vmul.f32 %v1964, 1.442695
          %v1983 = vpow.pop %v1982
          %v1984 = vmul.f32 %v1965, 1.442695
          %v1985 = vpow.pop %v1984
          %v1986 = vmul.f32 %v1966, 1.442695
          %v1987 = vpow.pop %v1986
          %v1988 = vmul.f32 %v1967, 1.442695
          %v1989 = vpow.pop %v1988
          %v1990 = vmul.f32 %v1968, 1.442695
          %v1991 = vpow.pop %v1990
          %v1992 = vmul.f32 %v1969, 1.442695
          %v1993 = vpow.pop %v1992
          %v1994 = vmul.f32 %v1970, 1.442695
          %v1995 = vpow.pop %v1994
          %v1996 = vmul.f32 %v1971, 1.442695
          %v1997 = vpow.pop %v1996
          %v1998 = vmul.f32 %v1972, 1.442695
          %v1999 = vpow.pop %v1998
          %v2000 = vmul.f32 %v1973, 1.442695
          %v2001 = vpow.pop %v2000
          %v2002 = vmul.f32 %v1974, 1.442695
          %v2003 = vpow.pop %v2002
          %v2004 = vmul.f32 %v1975, 1.442695
          %v2005 = vpow.pop %v2004
          %v2006 = vmul.f32 %v1976, 1.442695
          %v2007 = vpow.pop %v2006
          %v2008 = vmul.f32 %v1977, 1.442695
          %v2009 = vpow.pop %v2008
          %v2010 = vmul.f32 %v1930, %v1979
          %v2011 = vmul.f32 %v1931, %v1981
          %v2012 = vmul.f32 %v1932, %v1983
          %v2013 = vmul.f32 %v1933, %v1985
          %v2014 = vmul.f32 %v1934, %v1987
          %v2015 = vmul.f32 %v1935, %v1989
          %v2016 = vmul.f32 %v1936, %v1991
          %v2017 = vmul.f32 %v1937, %v1993
          %v2018 = vmul.f32 %v1938, %v1995
          %v2019 = vmul.f32 %v1939, %v1997
          %v2020 = vmul.f32 %v1940, %v1999
          %v2021 = vmul.f32 %v1941, %v2001
          %v2022 = vmul.f32 %v1942, %v2003
          %v2023 = vmul.f32 %v1943, %v2005
          %v2024 = vmul.f32 %v1944, %v2007
          %v2025 = vmul.f32 %v1945, %v2009
          %v2026 = vsub.f32 1.0, %v2010
          %v2027 = vsub.f32 1.0, %v2011
          %v2028 = vsub.f32 1.0, %v2012
          %v2029 = vsub.f32 1.0, %v2013
          %v2030 = vsub.f32 1.0, %v2014
          %v2031 = vsub.f32 1.0, %v2015
          %v2032 = vsub.f32 1.0, %v2016
          %v2033 = vsub.f32 1.0, %v2017
          %v2034 = vsub.f32 1.0, %v2018
          %v2035 = vsub.f32 1.0, %v2019
          %v2036 = vsub.f32 1.0, %v2020
          %v2037 = vsub.f32 1.0, %v2021
          %v2038 = vsub.f32 1.0, %v2022
          %v2039 = vsub.f32 1.0, %v2023
          %v2040 = vsub.f32 1.0, %v2024
          %v2041 = vsub.f32 1.0, %v2025
          %vm2042 = vcmp.ge.f32.partialorder %v1514, 0.0
          %vm2043 = vcmp.ge.f32.partialorder %v1515, 0.0
          %vm2044 = vcmp.ge.f32.partialorder %v1516, 0.0
          %vm2045 = vcmp.ge.f32.partialorder %v1517, 0.0
          %vm2046 = vcmp.ge.f32.partialorder %v1518, 0.0
          %vm2047 = vcmp.ge.f32.partialorder %v1519, 0.0
          %vm2048 = vcmp.ge.f32.partialorder %v1520, 0.0
          %vm2049 = vcmp.ge.f32.partialorder %v1521, 0.0
          %vm2050 = vcmp.ge.f32.partialorder %v1522, 0.0
          %vm2051 = vcmp.ge.f32.partialorder %v1523, 0.0
          %vm2052 = vcmp.ge.f32.partialorder %v1524, 0.0
          %vm2053 = vcmp.ge.f32.partialorder %v1525, 0.0
          %vm2054 = vcmp.ge.f32.partialorder %v1526, 0.0
          %vm2055 = vcmp.ge.f32.partialorder %v1527, 0.0
          %vm2056 = vcmp.ge.f32.partialorder %v1528, 0.0
          %vm2057 = vcmp.ge.f32.partialorder %v1529, 0.0
          %v2058 = vsub.f32 0.0, %v2026
          %v2059 = vsub.f32 0.0, %v2027
          %v2060 = vsub.f32 0.0, %v2028
          %v2061 = vsub.f32 0.0, %v2029
          %v2062 = vsub.f32 0.0, %v2030
          %v2063 = vsub.f32 0.0, %v2031
          %v2064 = vsub.f32 0.0, %v2032
          %v2065 = vsub.f32 0.0, %v2033
          %v2066 = vsub.f32 0.0, %v2034
          %v2067 = vsub.f32 0.0, %v2035
          %v2068 = vsub.f32 0.0, %v2036
          %v2069 = vsub.f32 0.0, %v2037
          %v2070 = vsub.f32 0.0, %v2038
          %v2071 = vsub.f32 0.0, %v2039
          %v2072 = vsub.f32 0.0, %v2040
          %v2073 = vsub.f32 0.0, %v2041
          %v2074 = vsel %vm2042, %v2026, %v2058
          %v2075 = vsel %vm2043, %v2027, %v2059
          %v2076 = vsel %vm2044, %v2028, %v2060
          %v2077 = vsel %vm2045, %v2029, %v2061
          %v2078 = vsel %vm2046, %v2030, %v2062
          %v2079 = vsel %vm2047, %v2031, %v2063
          %v2080 = vsel %vm2048, %v2032, %v2064
          %v2081 = vsel %vm2049, %v2033, %v2065
          %v2082 = vsel %vm2050, %v2034, %v2066
          %v2083 = vsel %vm2051, %v2035, %v2067
          %v2084 = vsel %vm2052, %v2036, %v2068
          %v2085 = vsel %vm2053, %v2037, %v2069
          %v2086 = vsel %vm2054, %v2038, %v2070
          %v2087 = vsel %vm2055, %v2039, %v2071
          %v2088 = vsel %vm2056, %v2040, %v2072
          %v2089 = vsel %vm2057, %v2041, %v2073
          %v2090 = vadd.f32 %v2074, 1.0
          %v2091 = vadd.f32 %v2075, 1.0
          %v2092 = vadd.f32 %v2076, 1.0
          %v2093 = vadd.f32 %v2077, 1.0
          %v2094 = vadd.f32 %v2078, 1.0
          %v2095 = vadd.f32 %v2079, 1.0
          %v2096 = vadd.f32 %v2080, 1.0
          %v2097 = vadd.f32 %v2081, 1.0
          %v2098 = vadd.f32 %v2082, 1.0
          %v2099 = vadd.f32 %v2083, 1.0
          %v2100 = vadd.f32 %v2084, 1.0
          %v2101 = vadd.f32 %v2085, 1.0
          %v2102 = vadd.f32 %v2086, 1.0
          %v2103 = vadd.f32 %v2087, 1.0
          %v2104 = vadd.f32 %v2088, 1.0
          %v2105 = vadd.f32 %v2089, 1.0
          %v2106 = vmul.f32 %v1498, %v2090
          %v2107 = vmul.f32 %v1499, %v2091
          %v2108 = vmul.f32 %v1500, %v2092
          %v2109 = vmul.f32 %v1501, %v2093
          %v2110 = vmul.f32 %v1502, %v2094
          %v2111 = vmul.f32 %v1503, %v2095
          %v2112 = vmul.f32 %v1504, %v2096
          %v2113 = vmul.f32 %v1505, %v2097
          %v2114 = vmul.f32 %v1506, %v2098
          %v2115 = vmul.f32 %v1507, %v2099
          %v2116 = vmul.f32 %v1508, %v2100
          %v2117 = vmul.f32 %v1509, %v2101
          %v2118 = vmul.f32 %v1510, %v2102
          %v2119 = vmul.f32 %v1511, %v2103
          %v2120 = vmul.f32 %v1512, %v2104
          %v2121 = vmul.f32 %v1513, %v2105
          %v2122 = vld [vmem:[#allocation16] sm:$0x1]
          %v2124 = vperm.slane %v2122, 0
          %v2126 = vmul.f32 %v2106, %v2124
          %v2127 = vmul.f32 %v2107, %v2124
          %v2128 = vmul.f32 %v2108, %v2124
          %v2129 = vmul.f32 %v2109, %v2124
          %v2130 = vmul.f32 %v2110, %v2124
          %v2131 = vmul.f32 %v2111, %v2124
          %v2132 = vmul.f32 %v2112, %v2124
          %v2133 = vmul.f32 %v2113, %v2124
          %v2134 = vmul.f32 %v2114, %v2124
          %v2135 = vmul.f32 %v2115, %v2124
          %v2136 = vmul.f32 %v2116, %v2124
          %v2137 = vmul.f32 %v2117, %v2124
          %v2138 = vmul.f32 %v2118, %v2124
          %v2139 = vmul.f32 %v2119, %v2124
          %v2140 = vmul.f32 %v2120, %v2124
          %v2141 = vmul.f32 %v2121, %v2124
          %2142 = vadd.xlane.f32.xlu0 %v2126
          %v2143 = vpop.xlane.xlu0 %2142
          %2144 = vadd.xlane.f32.xlu0 %v2127
          %v2145 = vpop.xlane.xlu0 %2144
          %2146 = vadd.xlane.f32.xlu0 %v2128
          %v2147 = vpop.xlane.xlu0 %2146
          %2148 = vadd.xlane.f32.xlu0 %v2129
          %v2149 = vpop.xlane.xlu0 %2148
          %2150 = vadd.xlane.f32.xlu0 %v2130
          %v2151 = vpop.xlane.xlu0 %2150
          %2152 = vadd.xlane.f32.xlu0 %v2131
          %v2153 = vpop.xlane.xlu0 %2152
          %2154 = vadd.xlane.f32.xlu0 %v2132
          %v2155 = vpop.xlane.xlu0 %2154
          %2156 = vadd.xlane.f32.xlu0 %v2133
          %v2157 = vpop.xlane.xlu0 %2156
          %2158 = vadd.xlane.f32.xlu0 %v2134
          %v2159 = vpop.xlane.xlu0 %2158
          %2160 = vadd.xlane.f32.xlu0 %v2135
          %v2161 = vpop.xlane.xlu0 %2160
          %2162 = vadd.xlane.f32.xlu0 %v2136
          %v2163 = vpop.xlane.xlu0 %2162
          %2164 = vadd.xlane.f32.xlu0 %v2137
          %v2165 = vpop.xlane.xlu0 %2164
          %2166 = vadd.xlane.f32.xlu0 %v2138
          %v2167 = vpop.xlane.xlu0 %2166
          %2168 = vadd.xlane.f32.xlu0 %v2139
          %v2169 = vpop.xlane.xlu0 %2168
          %2170 = vadd.xlane.f32.xlu0 %v2140
          %v2171 = vpop.xlane.xlu0 %2170
          %2172 = vadd.xlane.f32.xlu0 %v2141
          %v2173 = vpop.xlane.xlu0 %2172
          %vm2174 = vcmask 7168
          %v2175 = vsel %vm2174, %v2143, %v2145
          %vm2176 = vcmask 15360
          %v2177 = vsel %vm2176, %v2175, %v2147
          %vm2178 = vcmask 23552
          %v2179 = vsel %vm2178, %v2177, %v2149
          %vm2180 = vcmask 31744
          %v2181 = vsel %vm2180, %v2179, %v2151
          %vm2182 = vcmask 39936
          %v2183 = vsel %vm2182, %v2181, %v2153
          %vm2184 = vcmask 48128
          %v2185 = vsel %vm2184, %v2183, %v2155
          %vm2186 = vcmask 56320
          %v2187 = vsel %vm2186, %v2185, %v2157
          %vm2188 = vcmask 64512
          %v2189 = vsel %vm2188, %v2187, %v2159
          %vm2190 = vcmask 72704
          %v2191 = vsel %vm2190, %v2189, %v2161
          %vm2192 = vcmask 80896
          %v2193 = vsel %vm2192, %v2191, %v2163
          %vm2194 = vcmask 89088
          %v2195 = vsel %vm2194, %v2193, %v2165
          %vm2196 = vcmask 97280
          %v2197 = vsel %vm2196, %v2195, %v2167
          %vm2198 = vcmask 105472
          %v2199 = vsel %vm2198, %v2197, %v2169
          %vm2200 = vcmask 113664
          %v2201 = vsel %vm2200, %v2199, %v2171
          %vm2202 = vcmask 121856
          %v2203 = vsel %vm2202, %v2201, %v2173
          %v2204 = vld [vmem:[#allocation3] sm:$0x1]
          %v2206 = vperm.slane %v2204, 0
          %2207 = vset.pattern.permute.xlu0 0
          %2208 = vperm.xlu0 %2207, %v2206
          %v2209 = vpop.permute.xlu0 %2208
          %v2211 = vadd.f32 %v2203, %v2209
          %vm2212 = vcmask 130048
          %2213 = vst.msk [vmem:[#allocation18] sm:$0xff] %vm2212, %v2211
        $region100: #{tpu_custom_call.1} parent=55 // pred_fallthru
          _
        // Predicated region
        $region101: #{tpu_custom_call.1} parent=55 // pred_check
          %p2214 = pneg %p264
        $region102: #{tpu_custom_call.1} parent=55 // pred_check_branch
          %2216 = sbr.rel (%p2214) target = $region104
        $region103: #{tpu_custom_call.1} parent=55 // pred_region
          %2218 = vsyncadd [#allocation6], 0
          %s2219 = smul.addr %s34, 8
          %s2220 = scalar_lea.hbm %s9, %s2219
          %s2222 = sshll.u32 [#allocation18], 4
          %s2223 = int_to_ptr.vmem [resolvable:$true] %s2222
          %s2224 = sshll.u32 %s2220, 4
          %s2225 = int_to_ptr.hbm [resolvable:$true] %s2224
          %2227 = dma.vmem_to_hbm [thread:$0]  %s2223, 128, %s2225, [#allocation6]
        $region104: #{tpu_custom_call.1} parent=55 // pred_fallthru
          _
        // Predicated region
        $region105: #{tpu_custom_call.1} parent=55 // pred_check
          %p2228 = pneg %p264
        $region106: #{tpu_custom_call.1} parent=55 // pred_check_branch
          %2230 = sbr.rel (%p2228) target = $region108
        $region107: #{tpu_custom_call.1} parent=55 // pred_region
          %2232 = dma.done [#allocation6], 128
        $region108: #{tpu_custom_call.1} parent=55 // pred_fallthru
          _
      $region56: #{tpu_custom_call.1} parent=5 // pred_fallthru
        _
      %p2233 = scmp.le.s32.totalorder 2, %s25
      // Predicated region
      $region109: #{tpu_custom_call.1} parent=5 // pred_check
        %p2234 = pneg %p2233
      $region110: #{tpu_custom_call.1} parent=5 // pred_check_branch
        %2236 = sbr.rel (%p2234) target = $region112
      $region111: #{tpu_custom_call.1} parent=5 // pred_region
        %s2237 = ssub.s32 %s25, 2
      $region112: #{tpu_custom_call.1} parent=5 // pred_fallthru
        _
    $region6: #{tpu_custom_call.1} parent=1 // loop_footer
      %s29 = sadd.s32 1, %s25
    $region7: #{tpu_custom_call.1} parent=1 // loop_footer_branch
      %24 = sbr.rel target = $region3
    $region8: #{tpu_custom_call.1} parent=1 // loop_exit
      _
    %2238 = vsyncpa [#allocation5], 1
    %s2239 = scalar_lea.sflag [#allocation5], 1
    %2240 = vsyncpa %s2239, 1
    %2241 = vsyncpa [#allocation8], 1
    %2242 = vsyncpa [#allocation11], 1
    %s2243 = scalar_lea.sflag [#allocation11], 1
    %2244 = vsyncpa %s2243, 1
    %2245 = vsyncpa [#allocation14], 1
    %2246 = vsyncpa [#allocation17], 1
    %2247 = vsyncpa [#allocation6], 1
    %s2248 = scalar_lea.sflag [#allocation6], 1
    %2249 = vsyncpa %s2248, 1

</llo_original>
